<compile_context>
chip_gen: v5e
topology: v5e:2x2
jax: 0.10.0
libtpu: 0.0.40
codegen_flags: <defaults>
</compile_context>

<pallas_src>
import functools

import jax
import jax.numpy as jnp
import numpy as np
from jax.experimental import pallas as pl
from jax.experimental.pallas import tpu as pltpu

_EPS = 1e-5
_NEG_SLOPE = 0.2
_LANE = 128


def _round_up(x, m):
    return ((x + m - 1) // m) * m


# ---------------------------------------------------------------------------
# Hardware-derived tiling constants
#   v5e/v6e: 128 MiB VMEM, 1 TensorCore   |   v7x: 64 MiB VMEM, 2 TensorCores
# ---------------------------------------------------------------------------
def _tpu_vmem_capacity_bytes():
    try:
        return int(pltpu.get_tpu_info().vmem_capacity_bytes)
    except Exception:
        return 64 * 1024 * 1024                      # conservative fallback


_VMEM_CAP = _tpu_vmem_capacity_bytes()
_SMALL_VMEM = _VMEM_CAP <= 80 * 1024 * 1024          # v7x-like
_VMEM_LIMIT = min(_VMEM_CAP // 2, 64 * 1024 * 1024)  # scoped-VMEM limit per call
_TILE_BUDGET = _VMEM_LIMIT - 8 * 1024 * 1024         # headroom for compiler scratch
_TILE_M_CAP = 512 if _SMALL_VMEM else 1024
_FORCE_TWO_TILES = _SMALL_VMEM                       # use both TCs on v7x


def _pick_tile_m(m, k_pad, cout_pad, out_itemsize):
    """Largest M tile (mult. of 8) whose double-buffered working set fits."""
    per_row = 2 * k_pad * 2 + 2 * cout_pad * out_itemsize + cout_pad * 4
    fixed = 2 * k_pad * cout_pad * 2 + 4 * 8 * cout_pad * 4
    avail = max(_TILE_BUDGET - fixed, 8 * per_row)
    tile = min(_TILE_M_CAP, avail // per_row)
    tile = max(8, (tile // 8) * 8)
    m8 = _round_up(m, 8)
    tile = min(tile, m8)
    if _FORCE_TWO_TILES and m8 >= 16 and tile >= m8:
        tile = max(8, ((m8 // 2) // 8) * 8)          # guarantee >=2 grid steps (v7x)
    return tile


# ---------------------------------------------------------------------------
# Pallas kernels
# ---------------------------------------------------------------------------
def _conv_act_kernel(x_ref, w_ref, o_ref, *, do_act):
    # x_ref: (TILE_M, K_pad) bf16   w_ref: (K_pad, Cout_pad) bf16
    y = jnp.dot(x_ref[...], w_ref[...], preferred_element_type=jnp.float32)
    if do_act:
        y = jnp.where(y >= 0.0, y, _NEG_SLOPE * y)
    o_ref[...] = y.astype(o_ref.dtype)               # lane-dense (bf16 or f32) store


def _conv_stats_kernel(x_ref, w_ref, o_ref, st_ref):
    # conv matmul + per-tile per-channel sum / sum-of-squares (BN stats), one pass.
    y = jnp.dot(x_ref[...], w_ref[...], preferred_element_type=jnp.float32)
    o_ref[...] = y
    c = y.shape[1]
    s = jnp.sum(y, axis=0, keepdims=True)            # (1, Cout_pad)
    ss = jnp.sum(y * y, axis=0, keepdims=True)       # (1, Cout_pad)
    rows = jax.lax.broadcasted_iota(jnp.int32, (8, c), 0)
    st = jnp.where(rows == 0, jnp.broadcast_to(s, (8, c)), 0.0)
    st = st + jnp.where(rows == 1, jnp.broadcast_to(ss, (8, c)), 0.0)
    st_ref[0, :, :] = st                              # row 0: sum, row 1: sumsq


# ---------------------------------------------------------------------------
# Conv-as-matmul dispatch (M-tiled, auto-pipelined, "parallel" grid)
# ---------------------------------------------------------------------------
def _conv_pallas(patches, w2d, *, with_stats, do_act, out_dtype):
    M, K = patches.shape
    K_pad, Cout_pad = w2d.shape
    out_itemsize = jnp.dtype(out_dtype).itemsize
    tile = _pick_tile_m(M, K_pad, Cout_pad, out_itemsize)
    M_pad = _round_up(M, tile)
    patches = jnp.pad(patches, ((0, M_pad - M), (0, K_pad - K)))
    n_tiles = M_pad // tile
    grid = (n_tiles,)

    cparams = pltpu.CompilerParams(dimension_semantics=("parallel",),
                                   vmem_limit_bytes=_VMEM_LIMIT)
    cost = pl.CostEstimate(
        flops=2 * M_pad * K_pad * Cout_pad,
        transcendentals=0,
        bytes_accessed=(M_pad * K_pad * 2 + K_pad * Cout_pad * 2
                        + M_pad * Cout_pad * out_itemsize))
    in_specs = [pl.BlockSpec((tile, K_pad), lambda i: (i, 0)),
                pl.BlockSpec((K_pad, Cout_pad), lambda i: (0, 0))]

    if with_stats:
        out_shape = (jax.ShapeDtypeStruct((M_pad, Cout_pad), jnp.float32),
                     jax.ShapeDtypeStruct((n_tiles, 8, Cout_pad), jnp.float32))
        out_specs = (pl.BlockSpec((tile, Cout_pad), lambda i: (i, 0)),
                     pl.BlockSpec((1, 8, Cout_pad), lambda i: (i, 0, 0)))
        y, st = pl.pallas_call(
            _conv_stats_kernel, out_shape=out_shape, grid=grid,
            in_specs=in_specs, out_specs=out_specs,
            compiler_params=cparams, cost_estimate=cost)(patches, w2d)
        return y, st

    out_shape = jax.ShapeDtypeStruct((M_pad, Cout_pad), out_dtype)
    out_specs = pl.BlockSpec((tile, Cout_pad), lambda i: (i, 0))
    y = pl.pallas_call(
        functools.partial(_conv_act_kernel, do_act=do_act),
        out_shape=out_shape, grid=grid,
        in_specs=in_specs, out_specs=out_specs,
        compiler_params=cparams, cost_estimate=cost)(patches, w2d)
    return y, None


# ---------------------------------------------------------------------------
# XLA glue: im2col for k=4, s=2, p=1 (fused with the previous layer's affine)
# ---------------------------------------------------------------------------
def _im2col(a):
    # a: (N, H, W, C) bf16 -> ((N*OH*OW, 16*C) bf16, (N, OH, OW)); K order (kh, kw, c)
    N, H, W, C = a.shape
    OH, OW = H // 2, W // 2
    ap = jnp.pad(a, ((0, 0), (1, 1), (1, 1), (0, 0)))
    cols = [ap[:, kh:kh + 2 * OH:2, kw:kw + 2 * OW:2, :]
            for kh in range(4) for kw in range(4)]
    patches = jnp.stack(cols, axis=3).reshape(N * OH * OW, 16 * C)
    return patches, (N, OH, OW)


# ---------------------------------------------------------------------------
# Parameter repacking (done ONCE, outside the jitted forward)
# ---------------------------------------------------------------------------
def prepare_params(params):
    """Repack per-layer (w[Cout,Cin,4,4], gamma, beta) into lane-dense bf16 matrices.

    Layer 0 contracts over the true input channels; layers >=1 contract over the
    lane-padded channel layout the previous layer hands over (padded rows are 0).
    """
    prepped = []
    for i, (w, gamma, beta) in enumerate(params):
        w = jnp.asarray(w, jnp.float32)
        cout, cin, kh, kw = w.shape
        assert (kh, kw) == (4, 4)
        cout_pad = _round_up(cout, _LANE)
        cin_eff = cin if i == 0 else _round_up(cin, _LANE)
        k = 16 * cin_eff
        k_pad = _round_up(k, _LANE)
        w4 = jnp.zeros((4, 4, cin_eff, cout_pad), jnp.float32)
        w4 = w4.at[:, :, :cin, :cout].set(jnp.transpose(w, (2, 3, 1, 0)))
        w2d = jnp.pad(w4.reshape(k, cout_pad), ((0, k_pad - k), (0, 0)))
        prepped.append((w2d.astype(jnp.bfloat16),
                        jnp.asarray(gamma, jnp.float32),
                        jnp.asarray(beta, jnp.float32)))
    return prepped


# ---------------------------------------------------------------------------
# Discriminator forward (jitted stack of one-pallas_call-per-layer)
# ---------------------------------------------------------------------------
@functools.partial(jax.jit, static_argnames=("activation_fn",))
def discriminator_forward(x_nchw, prepped_params, activation_fn=True):
    n = len(prepped_params)
    act = jnp.transpose(x_nchw.astype(jnp.float32), (0, 2, 3, 1)).astype(jnp.bfloat16)
    out = None
    for i, (w2d, gamma, beta) in enumerate(prepped_params):
        is_first, is_last = i == 0, i == n - 1
        do_bn = (not is_first) and (not is_last)
        do_act = activation_fn and (not is_last)
        Cout = gamma.shape[0]
        Cout_pad = w2d.shape[1]

        patches, (N, OH, OW) = _im2col(act)
        M = N * OH * OW

        if do_bn:
            # One fused pallas_call: conv matmul + per-tile channel sum / sumsq.
            y, st = _conv_pallas(patches, w2d, with_stats=True,
                                 do_act=False, out_dtype=jnp.float32)
            s = jnp.sum(st[:, 0, :], axis=0)
            ss = jnp.sum(st[:, 1, :], axis=0)
            mean = s / M
            var = jnp.maximum(ss / M - mean * mean, 0.0)   # biased (training-mode) var
            gamma_p = jnp.zeros((Cout_pad,), jnp.float32).at[:Cout].set(gamma)
            beta_p = jnp.zeros((Cout_pad,), jnp.float32).at[:Cout].set(beta)
            scale = gamma_p * jax.lax.rsqrt(var + _EPS)
            shift = beta_p - mean * scale
            a = y[:M] * scale + shift                      # fused into next im2col
            if do_act:
                a = jnp.where(a >= 0.0, a, _NEG_SLOPE * a)
            act = a.reshape(N, OH, OW, Cout_pad).astype(jnp.bfloat16)
        elif is_last:
            y, _ = _conv_pallas(patches, w2d, with_stats=False,
                                do_act=False, out_dtype=jnp.float32)
            out = y[:M, :Cout].reshape(N, OH, OW, Cout)
        else:
            # First layer (LeakyReLU fused in-kernel), bf16 lane-dense handover.
            y, _ = _conv_pallas(patches, w2d, with_stats=False,
                                do_act=do_act, out_dtype=jnp.bfloat16)
            act = y[:M].reshape(N, OH, OW, Cout_pad)
    return jnp.transpose(out, (0, 3, 1, 2))                # NHWC -> NCHW once


# ---------------------------------------------------------------------------
# Pure-JAX reference (lax.conv) used only for a correctness check.
# Conv operands are rounded to bf16 to mirror the MXU operand precision.
# ---------------------------------------------------------------------------
def _reference_forward(x, params, *, activation_fn=True):
    num_layers = len(params)
    for i, (w, g, b) in enumerate(params):
        xb = x.astype(jnp.bfloat16).astype(jnp.float32)
        wb = w.astype(jnp.bfloat16).astype(jnp.float32)
        y = jax.lax.conv_general_dilated(
            xb, wb, window_strides=(2, 2), padding=((1, 1), (1, 1)),
            dimension_numbers=("NCHW", "OIHW", "NCHW"),
            precision=jax.lax.Precision.HIGHEST)
        is_first = (i == 0)
        is_last = (i == num_layers - 1)
        if (not is_first) and (not is_last):
            mean = jnp.mean(y, axis=(0, 2, 3), keepdims=True)
            var = jnp.mean((y - mean) ** 2, axis=(0, 2, 3), keepdims=True)
            y = (y - mean) * jax.lax.rsqrt(var + _EPS)
            y = y * g.reshape(1, -1, 1, 1) + b.reshape(1, -1, 1, 1)
        if activation_fn and (not is_last):
            y = jnp.where(y >= 0.0, y, _NEG_SLOPE * y)
        x = y
    return x


if __name__ == "__main__":
    # Discriminator(d_layers=[4, 8, 16, 1], activation_fn=True, spectral_norm=False)
    d_layers = [4, 8, 16, 1]
    key = jax.random.PRNGKey(0)

    params = []
    for i in range(len(d_layers) - 1):
        key, wk, gk, bk = jax.random.split(key, 4)
        cin, cout = d_layers[i], d_layers[i + 1]
        w = 0.1 * jax.random.normal(wk, (cout, cin, 4, 4), dtype=jnp.float32)
        gamma = 1.0 + 0.1 * jax.random.normal(gk, (cout,), dtype=jnp.float32)
        beta = 0.1 * jax.random.normal(bk, (cout,), dtype=jnp.float32)
        params.append((w, gamma, beta))

    key, xk = jax.random.split(key)
    x = jax.random.normal(xk, (2, 4, 16, 16), dtype=jnp.float32)       # NCHW

    prepped = prepare_params(params)              # one-time weight repack (outside jit)
    out = discriminator_forward(x, prepped, activation_fn=True)
    out = jax.block_until_ready(out)

    ref = jax.block_until_ready(_reference_forward(x, params, activation_fn=True))
    np.testing.assert_allclose(np.asarray(out), np.asarray(ref), rtol=2e-3, atol=2e-3)
    assert out.shape == (2, 1, 2, 2), out.shape

    print("KERNEL_OK")
</pallas_src>

<mosaic_0001>
module attributes {stable_mosaic.version = 11 : i64} {
  func.func @_conv_act_kernel(%arg0: i32, %arg1: memref<64x128xbf16, #tpu.memory_space<vmem>>, %arg2: memref<128x128xbf16, #tpu.memory_space<vmem>>, %arg3: memref<64x128xbf16, #tpu.memory_space<vmem>>) attributes {dimension_semantics = [#tpu.dimension_semantics<parallel>], iteration_bounds = array<i64: 2>, scalar_prefetch = 0 : i64, scratch_operands = 0 : i64, tpu.core_type = #tpu.core_type<tc>, window_params = [{transform_indices = @transform_0, window_bounds = array<i64: 64, 128>}, {pipeline_mode = #tpu.pipeline_mode<synchronous>, transform_indices = @transform_1, window_bounds = array<i64: 128, 128>}, {transform_indices = @transform_2, window_bounds = array<i64: 64, 128>}]} {
    %c0 = arith.constant 0 : index
    %c0_0 = arith.constant 0 : index
    %0 = vector.load %arg1[%c0, %c0_0] : memref<64x128xbf16, #tpu.memory_space<vmem>>, vector<64x128xbf16>
    %c0_1 = arith.constant 0 : index
    %c0_2 = arith.constant 0 : index
    %1 = vector.load %arg2[%c0_1, %c0_2] : memref<128x128xbf16, #tpu.memory_space<vmem>>, vector<128x128xbf16>
    %cst = arith.constant dense<0.000000e+00> : vector<64x128xf32>
    %2 = tpu.matmul %0, %1, %cst {dimension_numbers = #tpu.dot_dimension_numbers<[1], [0], [0], [1], [0, 0, 1, 1], [], []>} : vector<64x128xbf16>, vector<128x128xbf16>, vector<64x128xf32> -> vector<64x128xf32>
    %cst_3 = arith.constant 0.000000e+00 : f32
    %3 = vector.broadcast %cst_3 : f32 to vector<64x128xf32>
    %4 = arith.cmpf oge, %2, %3 : vector<64x128xf32>
    %cst_4 = arith.constant 2.000000e-01 : f32
    %5 = vector.broadcast %cst_4 : f32 to vector<64x128xf32>
    %6 = arith.mulf %5, %2 : vector<64x128xf32>
    %7 = arith.select %4, %2, %6 : vector<64x128xi1>, vector<64x128xf32>
    %8 = arith.truncf %7 : vector<64x128xf32> to vector<64x128xbf16>
    %c0_5 = arith.constant 0 : index
    %c0_6 = arith.constant 0 : index
    %9 = vector.load %arg3[%c0_5, %c0_6] : memref<64x128xbf16, #tpu.memory_space<vmem>>, vector<64x128xbf16>
    tpu.vector_store %arg3[%c0_5, %c0_6], %8 {strides = array<i32>} : memref<64x128xbf16, #tpu.memory_space<vmem>>, vector<64x128xbf16>,
    return
  }
  func.func @transform_0(%arg0: i32) -> (i32, i32) {
    %c0_i32 = arith.constant 0 : i32
    %c0_i32_0 = arith.constant 0 : i32
    return %arg0, %c0_i32 : i32, i32
  }
  func.func @transform_1(%arg0: i32) -> (i32, i32) {
    %c0_i32 = arith.constant 0 : i32
    %c0_i32_0 = arith.constant 0 : i32
    %c0_i32_1 = arith.constant 0 : i32
    return %c0_i32, %c0_i32_0 : i32, i32
  }
  func.func @transform_2(%arg0: i32) -> (i32, i32) {
    %c0_i32 = arith.constant 0 : i32
    %c0_i32_0 = arith.constant 0 : i32
    return %arg0, %c0_i32 : i32, i32
  }
}

module attributes {stable_mosaic.version = 11 : i64} {
  func.func @_conv_stats_kernel(%arg0: i32, %arg1: memref<16x2048xbf16, #tpu.memory_space<vmem>>, %arg2: memref<2048x128xbf16, #tpu.memory_space<vmem>>, %arg3: memref<16x128xf32, #tpu.memory_space<vmem>>, %arg4: memref<1x8x128xf32, #tpu.memory_space<vmem>>) attributes {dimension_semantics = [#tpu.dimension_semantics<parallel>], iteration_bounds = array<i64: 2>, scalar_prefetch = 0 : i64, scratch_operands = 0 : i64, tpu.core_type = #tpu.core_type<tc>, window_params = [{transform_indices = @transform_0, window_bounds = array<i64: 16, 2048>}, {pipeline_mode = #tpu.pipeline_mode<synchronous>, transform_indices = @transform_1, window_bounds = array<i64: 2048, 128>}, {transform_indices = @transform_2, window_bounds = array<i64: 16, 128>}, {transform_indices = @transform_3, window_bounds = array<i64: 1, 8, 128>}]} {
    %c0 = arith.constant 0 : index
    %c0_0 = arith.constant 0 : index
    %0 = vector.load %arg1[%c0, %c0_0] : memref<16x2048xbf16, #tpu.memory_space<vmem>>, vector<16x2048xbf16>
    %c0_1 = arith.constant 0 : index
    %c0_2 = arith.constant 0 : index
    %1 = vector.load %arg2[%c0_1, %c0_2] : memref<2048x128xbf16, #tpu.memory_space<vmem>>, vector<2048x128xbf16>
    %cst = arith.constant dense<0.000000e+00> : vector<16x128xf32>
    %2 = tpu.matmul %0, %1, %cst {dimension_numbers = #tpu.dot_dimension_numbers<[1], [0], [0], [1], [0, 0, 1, 1], [], []>} : vector<16x2048xbf16>, vector<2048x128xbf16>, vector<16x128xf32> -> vector<16x128xf32>
    %c0_3 = arith.constant 0 : index
    %c0_4 = arith.constant 0 : index
    %3 = vector.load %arg3[%c0_3, %c0_4] : memref<16x128xf32, #tpu.memory_space<vmem>>, vector<16x128xf32>
    tpu.vector_store %arg3[%c0_3, %c0_4], %2 {strides = array<i32>} : memref<16x128xf32, #tpu.memory_space<vmem>>, vector<16x128xf32>,
    %cst_5 = arith.constant dense<0.000000e+00> : vector<128xf32>
    %4 = vector.multi_reduction <add>, %2, %cst_5 [0] : vector<16x128xf32> to vector<128xf32>
    %5 = vector.shape_cast %4 : vector<128xf32> to vector<1x128xf32>
    %6 = arith.mulf %2, %2 : vector<16x128xf32>
    %cst_6 = arith.constant dense<0.000000e+00> : vector<128xf32>
    %7 = vector.multi_reduction <add>, %6, %cst_6 [0] : vector<16x128xf32> to vector<128xf32>
    %8 = vector.shape_cast %7 : vector<128xf32> to vector<1x128xf32>
    %9 = tpu.iota {dimensions = array<i32: 0>} : vector<8x128xi32>
    %c0_i32 = arith.constant 0 : i32
    %10 = vector.broadcast %c0_i32 : i32 to vector<8x128xi32>
    %11 = arith.cmpi eq, %9, %10 : vector<8x128xi32>
    %12 = vector.shape_cast %5 : vector<1x128xf32> to vector<1x128xf32>
    %13 = vector.broadcast %12 : vector<1x128xf32> to vector<8x128xf32>
    %cst_7 = arith.constant 0.000000e+00 : f32
    %14 = vector.broadcast %cst_7 : f32 to vector<8x128xf32>
    %15 = arith.select %11, %13, %14 : vector<8x128xi1>, vector<8x128xf32>
    %c1_i32 = arith.constant 1 : i32
    %16 = vector.broadcast %c1_i32 : i32 to vector<8x128xi32>
    %17 = arith.cmpi eq, %9, %16 : vector<8x128xi32>
    %18 = vector.shape_cast %8 : vector<1x128xf32> to vector<1x128xf32>
    %19 = vector.broadcast %18 : vector<1x128xf32> to vector<8x128xf32>
    %cst_8 = arith.constant 0.000000e+00 : f32
    %20 = vector.broadcast %cst_8 : f32 to vector<8x128xf32>
    %21 = arith.select %17, %19, %20 : vector<8x128xi1>, vector<8x128xf32>
    %22 = arith.addf %15, %21 : vector<8x128xf32>
    %c0_9 = arith.constant 0 : index
    %c0_10 = arith.constant 0 : index
    %c0_11 = arith.constant 0 : index
    %23 = vector.load %arg4[%c0_9, %c0_10, %c0_11] : memref<1x8x128xf32, #tpu.memory_space<vmem>>, vector<1x8x128xf32>
    %24 = vector.shape_cast %23 : vector<1x8x128xf32> to vector<8x128xf32>
    %25 = vector.shape_cast %22 : vector<8x128xf32> to vector<1x8x128xf32>
    tpu.vector_store %arg4[%c0_9, %c0_10, %c0_11], %25 {strides = array<i32>} : memref<1x8x128xf32, #tpu.memory_space<vmem>>, vector<1x8x128xf32>,
    return
  }
  func.func @transform_0(%arg0: i32) -> (i32, i32) {
    %c0_i32 = arith.constant 0 : i32
    %c0_i32_0 = arith.constant 0 : i32
    return %arg0, %c0_i32 : i32, i32
  }
  func.func @transform_1(%arg0: i32) -> (i32, i32) {
    %c0_i32 = arith.constant 0 : i32
    %c0_i32_0 = arith.constant 0 : i32
    %c0_i32_1 = arith.constant 0 : i32
    return %c0_i32, %c0_i32_0 : i32, i32
  }
  func.func @transform_2(%arg0: i32) -> (i32, i32) {
    %c0_i32 = arith.constant 0 : i32
    %c0_i32_0 = arith.constant 0 : i32
    return %arg0, %c0_i32 : i32, i32
  }
  func.func @transform_3(%arg0: i32) -> (i32, i32, i32) {
    %c0_i32 = arith.constant 0 : i32
    %c0_i32_0 = arith.constant 0 : i32
    %c0_i32_1 = arith.constant 0 : i32
    return %arg0, %c0_i32, %c0_i32_0 : i32, i32, i32
  }
}

module attributes {stable_mosaic.version = 11 : i64} {
  func.func @_conv_act_kernel(%arg0: i32, %arg1: memref<8x2048xbf16, #tpu.memory_space<vmem>>, %arg2: memref<2048x128xbf16, #tpu.memory_space<vmem>>, %arg3: memref<8x128xf32, #tpu.memory_space<vmem>>) attributes {dimension_semantics = [#tpu.dimension_semantics<parallel>], iteration_bounds = array<i64: 1>, scalar_prefetch = 0 : i64, scratch_operands = 0 : i64, tpu.core_type = #tpu.core_type<tc>, window_params = [{transform_indices = @transform_0, window_bounds = array<i64: 8, 2048>}, {pipeline_mode = #tpu.pipeline_mode<synchronous>, transform_indices = @transform_1, window_bounds = array<i64: 2048, 128>}, {transform_indices = @transform_2, window_bounds = array<i64: 8, 128>}]} {
    %c0 = arith.constant 0 : index
    %c0_0 = arith.constant 0 : index
    %0 = vector.load %arg1[%c0, %c0_0] : memref<8x2048xbf16, #tpu.memory_space<vmem>>, vector<8x2048xbf16>
    %c0_1 = arith.constant 0 : index
    %c0_2 = arith.constant 0 : index
    %1 = vector.load %arg2[%c0_1, %c0_2] : memref<2048x128xbf16, #tpu.memory_space<vmem>>, vector<2048x128xbf16>
    %cst = arith.constant dense<0.000000e+00> : vector<8x128xf32>
    %2 = tpu.matmul %0, %1, %cst {dimension_numbers = #tpu.dot_dimension_numbers<[1], [0], [0], [1], [0, 0, 1, 1], [], []>} : vector<8x2048xbf16>, vector<2048x128xbf16>, vector<8x128xf32> -> vector<8x128xf32>
    %c0_3 = arith.constant 0 : index
    %c0_4 = arith.constant 0 : index
    %3 = vector.load %arg3[%c0_3, %c0_4] : memref<8x128xf32, #tpu.memory_space<vmem>>, vector<8x128xf32>
    tpu.vector_store %arg3[%c0_3, %c0_4], %2 {strides = array<i32>} : memref<8x128xf32, #tpu.memory_space<vmem>>, vector<8x128xf32>,
    return
  }
  func.func @transform_0(%arg0: i32) -> (i32, i32) {
    %c0_i32 = arith.constant 0 : i32
    %c0_i32_0 = arith.constant 0 : i32
    return %arg0, %c0_i32 : i32, i32
  }
  func.func @transform_1(%arg0: i32) -> (i32, i32) {
    %c0_i32 = arith.constant 0 : i32
    %c0_i32_0 = arith.constant 0 : i32
    %c0_i32_1 = arith.constant 0 : i32
    return %c0_i32, %c0_i32_0 : i32, i32
  }
  func.func @transform_2(%arg0: i32) -> (i32, i32) {
    %c0_i32 = arith.constant 0 : i32
    %c0_i32_0 = arith.constant 0 : i32
    return %arg0, %c0_i32 : i32, i32
  }
}

</mosaic_0001>

<llo_original>
// kernel: discriminator_forward.3
$region0: #{discriminator_forward.3}
  #allocation0 [shape = 'u32[]', space=smem, size = 0x4, offset = 0x4, fixed_abs, tag = 'smem constant byte address 0x4 - core index']
  #allocation1 [shape = 'u32[72,128]{1,0:T(1,128)}', space=vmem, size = 0x9000, scoped, tag = 'internal scratch']
  %s0 = inlined_call_operand.vmem [shape: bf16[128,128], index: 0, kind: input, shape index: {}]
  %s1 = inlined_call_operand.vmem [shape: bf16[128,128], index: 1, kind: input, shape index: {}]
  %s2 = inlined_call_operand.vmem [shape: bf16[128,128], index: 2, kind: output, shape index: {}]
  %s3 = sld [smem:[#allocation0]]
  $region41: #{discriminator_forward.3} parent=0
    _
  %s5 = ssub.s32 1, %s3
  %s6 = scalar_select 0, %s5, %s3
  loop: start=0, step=1, limit=4
  $region2: #{discriminator_forward.3} parent=0 // loop_pre_header
    _
  $region3: #{discriminator_forward.3} parent=0 // loop_header
    %s8 = sphi 0, %s12
    %p9 = scmp.ge.s32.totalorder %s8, 4
    %s18 = sphi 0, %s20
    %s21 = sphi 0, %s18
    %s22 = sphi 0, %s21
    %s38 = sphi 0, %s22
    %s42 = sphi 0, %s42
    %s44 = sphi 0, %s42
    %s45 = sphi 0, %s44
    %s59 = sphi 0, %s45
    %s65 = sphi 0, %s67
    %s68 = sphi 0, %s65
    %s69 = sphi 0, %s68
    %s85 = sphi 0, %s69
  $region4: #{discriminator_forward.3} parent=0 // loop_header_branch
    %11 = sbr.rel (%p9) target = $region8
  $region5: #{discriminator_forward.3} parent=0 // loop_body
    %s13 = ssub.s32 %s8, 1
    %s14 = ssub.s32 %s8, 2
    %s15 = sadd.s32 %s8, 1
    %s16 = ssub.s32 %s8, %s15
    %p17 = scmp.eq.s32.totalorder %s16, 0
    %s19 = sadd.s32 %s18, 1
    %s20 = scalar_select %p17, %s18, %s19
    %p23 = pneg %p17
    %p24 = scmp.eq.s32.totalorder %s8, 1
    %p25 = por %p23, %p24
    %p26 = scmp.ne.s32.totalorder %s18, %s21
    %p27 = scmp.eq.s32.totalorder %s8, 0
    %p28 = por %p26, %p27
    %p29 = scmp.ne.s32.totalorder %s18, %s21
    %p30 = scmp.eq.s32.totalorder %s13, 1
    %p31 = por %p29, %p30
    %p32 = scmp.ne.s32.totalorder %s21, %s22
    %p33 = scmp.eq.s32.totalorder %s13, 0
    %p34 = por %p32, %p33
    %p35 = scmp.ne.s32.totalorder %s21, %s22
    %p36 = scmp.eq.s32.totalorder %s14, 1
    %p37 = por %p35, %p36
    %p39 = scmp.ne.s32.totalorder %s22, %s38
    %p40 = scmp.eq.s32.totalorder %s14, 0
    %p41 = por %p39, %p40
    %s43 = sadd.s32 %s42, 1
    %p46 = scmp.eq.s32.totalorder %s8, 1
    %p47 = scmp.ne.s32.totalorder %s42, %s44
    %p48 = scmp.eq.s32.totalorder %s8, 0
    %p49 = por %p47, %p48
    %p50 = scmp.ne.s32.totalorder %s42, %s44
    %p51 = scmp.eq.s32.totalorder %s13, 1
    %p52 = por %p50, %p51
    %p53 = scmp.ne.s32.totalorder %s44, %s45
    %p54 = scmp.eq.s32.totalorder %s13, 0
    %p55 = por %p53, %p54
    %p56 = scmp.ne.s32.totalorder %s44, %s45
    %p57 = scmp.eq.s32.totalorder %s14, 1
    %p58 = por %p56, %p57
    %p60 = scmp.ne.s32.totalorder %s45, %s59
    %p61 = scmp.eq.s32.totalorder %s14, 0
    %p62 = por %p60, %p61
    %s63 = ssub.s32 %s8, %s15
    %p64 = scmp.eq.s32.totalorder %s63, 0
    %s66 = sadd.s32 %s65, 1
    %s67 = scalar_select %p64, %s65, %s66
    %p70 = pneg %p64
    %p71 = scmp.eq.s32.totalorder %s8, 1
    %p72 = por %p70, %p71
    %p73 = scmp.ne.s32.totalorder %s65, %s68
    %p74 = scmp.eq.s32.totalorder %s8, 0
    %p75 = por %p73, %p74
    %p76 = scmp.ne.s32.totalorder %s65, %s68
    %p77 = scmp.eq.s32.totalorder %s13, 1
    %p78 = por %p76, %p77
    %p79 = scmp.ne.s32.totalorder %s68, %s69
    %p80 = scmp.eq.s32.totalorder %s13, 0
    %p81 = por %p79, %p80
    %p82 = scmp.ne.s32.totalorder %s68, %s69
    %p83 = scmp.eq.s32.totalorder %s14, 1
    %p84 = por %p82, %p83
    %p86 = scmp.ne.s32.totalorder %s69, %s85
    %p87 = scmp.eq.s32.totalorder %s14, 0
    %p88 = por %p86, %p87
    %p89 = scmp.le.s32.totalorder 1, %s8
    %p90 = scmp.lt.s32.totalorder %s8, 3
    %p91 = pnand %p89, %p90
    %p92 = pneg %p91
    // Predicated region
    $region9: #{discriminator_forward.3} parent=5 // pred_check
      _
    $region10: #{discriminator_forward.3} parent=5 // pred_check_branch
      %94 = sbr.rel (%p91) target = $region12
    $region11: #{discriminator_forward.3} parent=5 // pred_region
      %s95 = ssub.s32 %s8, 1
      // Predicated region
      $region13: #{discriminator_forward.3} parent=11 // pred_check
        %p96 = pneg %p55
      $region14: #{discriminator_forward.3} parent=11 // pred_check_branch
        %98 = sbr.rel (%p96) target = $region16
      $region15: #{discriminator_forward.3} parent=11 // pred_region
        _
      $region16: #{discriminator_forward.3} parent=11 // pred_fallthru
        _
    $region12: #{discriminator_forward.3} parent=5 // pred_fallthru
      _
    %p99 = scmp.lt.s32.totalorder %s8, 2
    // Predicated region
    $region17: #{discriminator_forward.3} parent=5 // pred_check
      %p100 = pneg %p99
    $region18: #{discriminator_forward.3} parent=5 // pred_check_branch
      %102 = sbr.rel (%p100) target = $region20
    $region19: #{discriminator_forward.3} parent=5 // pred_region
      // Predicated region
      $region21: #{discriminator_forward.3} parent=19 // pred_check
        %p103 = pneg %p28
      $region22: #{discriminator_forward.3} parent=19 // pred_check_branch
        %105 = sbr.rel (%p103) target = $region24
      $region23: #{discriminator_forward.3} parent=19 // pred_region
        %s106 = smul.u32 8, %s8
        %p107 = scmp.lt.s32.totalorder %s106, 15
        %s108 = scalar_select %p107, %s106, 15
        %s109 = smul.addr %s108, 4
        %s110 = scalar_lea.vmem %s0, %s109
        %s111 = smul.u32 8, %s8
      $region24: #{discriminator_forward.3} parent=19 // pred_fallthru
        _
    $region20: #{discriminator_forward.3} parent=5 // pred_fallthru
      _
    %p112 = scmp.le.s32.totalorder 1, %s8
    %p113 = scmp.lt.s32.totalorder %s8, 3
    %p114 = pnand %p112, %p113
    %p115 = pneg %p114
    // Predicated region
    $region25: #{discriminator_forward.3} parent=5 // pred_check
      _
    $region26: #{discriminator_forward.3} parent=5 // pred_check_branch
      %117 = sbr.rel (%p114) target = $region28
    $region27: #{discriminator_forward.3} parent=5 // pred_region
      %s118 = ssub.s32 %s8, 1
      %s119 = smul.u32 8, %s13
      %p120 = scmp.lt.s32.totalorder %s119, 15
      %s121 = scalar_select %p120, %s119, 15
      %s122 = smul.addr %s121, 4
      %s123 = scalar_lea.vmem %s0, %s122
      %p124 = pneg %p34
      %p125 = pneg %p31
      %p126 = pneg %p55
      %p127 = pneg %p52
      %p128 = pneg %p81
      %p129 = pneg %p78
      %s130 = smul.u32 8, %s13
      %p131 = scmp.lt.s32.totalorder %s130, 15
      %s132 = scalar_select %p131, %s130, 15
      %s133 = smul.addr %s132, 4
      %s134 = scalar_lea.vmem %s2, %s133
      %s135 = smul.u32 8, %s13
      %p136 = scmp.lt.s32.totalorder %s135, 15
      %s137 = scalar_select %p136, %s135, 15
      %s138 = smul.addr %s137, 4
      %s139 = scalar_lea.vmem %s0, %s138
      %s140 = smul.u32 8, %s13
      %s141 = smul.u32 8, %s13
      %p142 = scmp.lt.s32.totalorder %s141, 15
      %s143 = scalar_select %p142, %s141, 15
      %s144 = smul.addr %s143, 4
      %s145 = scalar_lea.vmem %s2, %s144
      %s146 = smul.u32 8, %s13
      %v147 = vld [vmem:[%s139] sm:$0xf]
      %v148 = vld [vmem:[%s139 + $0x4] sm:$0xf]
      %v149 = vld [vmem:[%s139 + $0x8] sm:$0xf]
      %v150 = vld [vmem:[%s139 + $0xc] sm:$0xf]
      %v151 = vld [vmem:[%s139 + $0x10] sm:$0xf]
      %v152 = vld [vmem:[%s139 + $0x14] sm:$0xf]
      %v153 = vld [vmem:[%s139 + $0x18] sm:$0xf]
      %v154 = vld [vmem:[%s139 + $0x1c] sm:$0xf]
      %v155 = vld [vmem:[%s1] sm:$0xf]
      %v156 = vld [vmem:[%s1 + $0x4] sm:$0xf]
      %v157 = vld [vmem:[%s1 + $0x8] sm:$0xf]
      %v158 = vld [vmem:[%s1 + $0xc] sm:$0xf]
      %v159 = vld [vmem:[%s1 + $0x10] sm:$0xf]
      %v160 = vld [vmem:[%s1 + $0x14] sm:$0xf]
      %v161 = vld [vmem:[%s1 + $0x18] sm:$0xf]
      %v162 = vld [vmem:[%s1 + $0x1c] sm:$0xf]
      %v163 = vld [vmem:[%s1 + $0x20] sm:$0xf]
      %v164 = vld [vmem:[%s1 + $0x24] sm:$0xf]
      %v165 = vld [vmem:[%s1 + $0x28] sm:$0xf]
      %v166 = vld [vmem:[%s1 + $0x2c] sm:$0xf]
      %v167 = vld [vmem:[%s1 + $0x30] sm:$0xf]
      %v168 = vld [vmem:[%s1 + $0x34] sm:$0xf]
      %v169 = vld [vmem:[%s1 + $0x38] sm:$0xf]
      %v170 = vld [vmem:[%s1 + $0x3c] sm:$0xf]
      %v179 = vunpack.c.l.b16 %v147
      %v180 = vunpack.c.l.b16 %v148
      %v181 = vunpack.c.l.b16 %v149
      %v182 = vunpack.c.l.b16 %v150
      %v183 = vunpack.c.l.b16 %v151
      %v184 = vunpack.c.l.b16 %v152
      %v185 = vunpack.c.l.b16 %v153
      %v186 = vunpack.c.l.b16 %v154
      %v187 = vpack.c.b16 %v180, %v179
      %v188 = vpack.c.b16 %v182, %v181
      %v189 = vpack.c.b16 %v184, %v183
      %v190 = vpack.c.b16 %v186, %v185
      %v211 = vunpack.c.l.b16 %v155
      %v212 = vunpack.c.l.b16 %v156
      %v213 = vunpack.c.l.b16 %v157
      %v214 = vunpack.c.l.b16 %v158
      %v215 = vunpack.c.l.b16 %v159
      %v216 = vunpack.c.l.b16 %v160
      %v217 = vunpack.c.l.b16 %v161
      %v218 = vunpack.c.l.b16 %v162
      %v219 = vunpack.c.l.b16 %v163
      %v220 = vunpack.c.l.b16 %v164
      %v221 = vunpack.c.l.b16 %v165
      %v222 = vunpack.c.l.b16 %v166
      %v223 = vunpack.c.l.b16 %v167
      %v224 = vunpack.c.l.b16 %v168
      %v225 = vunpack.c.l.b16 %v169
      %v226 = vunpack.c.l.b16 %v170
      %v227 = vpack.c.b16 %v212, %v211
      %v228 = vpack.c.b16 %v214, %v213
      %v229 = vpack.c.b16 %v216, %v215
      %v230 = vpack.c.b16 %v218, %v217
      %v231 = vpack.c.b16 %v220, %v219
      %v232 = vpack.c.b16 %v222, %v221
      %v233 = vpack.c.b16 %v224, %v223
      %v234 = vpack.c.b16 %v226, %v225
      %243 = vmatpush.bf16.msra.mxu0 %v234
      %244 = vmatpush.bf16.msra.mxu0 %v233
      %245 = vmatpush.bf16.msra.mxu0 %v232
      %246 = vmatpush.bf16.msra.mxu0 %v231
      %247 = vmatpush.bf16.msra.mxu0 %v230
      %248 = vmatpush.bf16.msra.mxu0 %v229
      %249 = vmatpush.bf16.msra.mxu0 %v228
      %250 = vmatpush.bf16.msra.mxu0 %v227
      %251 = vmatmul.bf16.gmra.mxu0 %v187
      %v252 = vpop.f32.mrf.mxu0
      %v253 = vadd.f32 0.0, %v252
      %v254 = vpop.f32.mrf.mxu0
      %v255 = vadd.f32 0.0, %v254
      %256 = vmatmul.bf16.gmra.mxu0 %v188
      %v257 = vpop.f32.mrf.mxu0
      %v258 = vadd.f32 0.0, %v257
      %v259 = vpop.f32.mrf.mxu0
      %v260 = vadd.f32 0.0, %v259
      %261 = vmatmul.bf16.gmra.mxu0 %v189
      %v262 = vpop.f32.mrf.mxu0
      %v263 = vadd.f32 0.0, %v262
      %v264 = vpop.f32.mrf.mxu0
      %v265 = vadd.f32 0.0, %v264
      %266 = vmatmul.bf16.gmra.mxu0 %v190
      %v267 = vpop.f32.mrf.mxu0
      %v268 = vadd.f32 0.0, %v267
      %v269 = vpop.f32.mrf.mxu0
      %v270 = vadd.f32 0.0, %v269
      %271 = vdwg.mxu0
      %vm272 = vcmp.ge.f32.partialorder %v253, 0.0
      %vm273 = vcmp.ge.f32.partialorder %v255, 0.0
      %vm274 = vcmp.ge.f32.partialorder %v258, 0.0
      %vm275 = vcmp.ge.f32.partialorder %v260, 0.0
      %vm276 = vcmp.ge.f32.partialorder %v263, 0.0
      %vm277 = vcmp.ge.f32.partialorder %v265, 0.0
      %vm278 = vcmp.ge.f32.partialorder %v268, 0.0
      %vm279 = vcmp.ge.f32.partialorder %v270, 0.0
      %v280 = vmul.f32 %v253, 0.2
      %v281 = vmul.f32 %v255, 0.2
      %v282 = vmul.f32 %v258, 0.2
      %v283 = vmul.f32 %v260, 0.2
      %v284 = vmul.f32 %v263, 0.2
      %v285 = vmul.f32 %v265, 0.2
      %v286 = vmul.f32 %v268, 0.2
      %v287 = vmul.f32 %v270, 0.2
      %v288 = vsel %vm272, %v253, %v280
      %v289 = vsel %vm273, %v255, %v281
      %v290 = vsel %vm274, %v258, %v282
      %v291 = vsel %vm275, %v260, %v283
      %v292 = vsel %vm276, %v263, %v284
      %v293 = vsel %vm277, %v265, %v285
      %v294 = vsel %vm278, %v268, %v286
      %v295 = vsel %vm279, %v270, %v287
      %v296 = vpack.c.bf16 %v288, %v288
      %v297 = vpack.c.bf16 %v289, %v289
      %v298 = vpack.c.bf16 %v290, %v290
      %v299 = vpack.c.bf16 %v291, %v291
      %v300 = vpack.c.bf16 %v292, %v292
      %v301 = vpack.c.bf16 %v293, %v293
      %v302 = vpack.c.bf16 %v294, %v294
      %v303 = vpack.c.bf16 %v295, %v295
      %304 = vst [vmem:[%s145] sm:$0xf] %v296
      %305 = vst [vmem:[%s145 + $0x4] sm:$0xf] %v297
      %306 = vst [vmem:[%s145 + $0x8] sm:$0xf] %v298
      %307 = vst [vmem:[%s145 + $0xc] sm:$0xf] %v299
      %308 = vst [vmem:[%s145 + $0x10] sm:$0xf] %v300
      %309 = vst [vmem:[%s145 + $0x14] sm:$0xf] %v301
      %310 = vst [vmem:[%s145 + $0x18] sm:$0xf] %v302
      %311 = vst [vmem:[%s145 + $0x1c] sm:$0xf] %v303
      %s312 = smul.u32 8, %s13
      %p313 = scmp.lt.s32.totalorder %s312, 15
      %s314 = scalar_select %p313, %s312, 15
      %s315 = smul.addr %s314, 4
      %s316 = scalar_lea.vmem %s2, %s315
      // Predicated region
      $region29: #{discriminator_forward.3} parent=27 // pred_check
        %p317 = pneg %p78
      $region30: #{discriminator_forward.3} parent=27 // pred_check_branch
        %319 = sbr.rel (%p317) target = $region32
      $region31: #{discriminator_forward.3} parent=27 // pred_region
        %s320 = smul.u32 8, %s13
      $region32: #{discriminator_forward.3} parent=27 // pred_fallthru
        _
    $region28: #{discriminator_forward.3} parent=5 // pred_fallthru
      _
    %p321 = scmp.le.s32.totalorder 2, %s8
    // Predicated region
    $region33: #{discriminator_forward.3} parent=5 // pred_check
      %p322 = pneg %p321
    $region34: #{discriminator_forward.3} parent=5 // pred_check_branch
      %324 = sbr.rel (%p322) target = $region36
    $region35: #{discriminator_forward.3} parent=5 // pred_region
      %s325 = ssub.s32 %s8, 2
      // Predicated region
      $region37: #{discriminator_forward.3} parent=35 // pred_check
        %p326 = pneg %p84
      $region38: #{discriminator_forward.3} parent=35 // pred_check_branch
        %328 = sbr.rel (%p326) target = $region40
      $region39: #{discriminator_forward.3} parent=35 // pred_region
        %s329 = smul.u32 8, %s14
        %p330 = scmp.lt.s32.totalorder %s329, 15
        %s331 = scalar_select %p330, %s329, 15
        %s332 = smul.addr %s331, 4
        %s333 = scalar_lea.vmem %s2, %s332
      $region40: #{discriminator_forward.3} parent=35 // pred_fallthru
        _
    $region36: #{discriminator_forward.3} parent=5 // pred_fallthru
      _
  $region6: #{discriminator_forward.3} parent=0 // loop_footer
    %s12 = sadd.s32 1, %s8
  $region7: #{discriminator_forward.3} parent=0 // loop_footer_branch
    %7 = sbr.rel target = $region3
  $region8: #{discriminator_forward.3} parent=0 // loop_exit
    _

// kernel: discriminator_forward.4
$region0: #{discriminator_forward.4}
  #allocation0 [shape = 'u32[]', space=smem, size = 0x4, offset = 0x4, fixed_abs, tag = 'smem constant byte address 0x4 - core index']
  #allocation1 [shape = 'u32[72,128]{1,0:T(1,128)}', space=vmem, size = 0x9000, scoped, tag = 'internal scratch']
  %s0 = inlined_call_operand.vmem [shape: bf16[32,2048], index: 0, kind: input, shape index: {}]
  %s1 = inlined_call_operand.vmem [shape: bf16[2048,128], index: 1, kind: input, shape index: {}]
  %s2 = inlined_call_operand.vmem [shape: f32[32,128], index: 2, kind: output, shape index: {0}]
  %s3 = inlined_call_operand.vmem [shape: f32[2,8,128], index: 3, kind: output, shape index: {1}]
  %4 = xla_tuple %s2, %s3
  %s5 = sld [smem:[#allocation0]]
  $region49: #{discriminator_forward.4} parent=0
    _
  %s7 = ssub.s32 1, %s5
  %s8 = scalar_select 0, %s7, %s5
  loop: start=0, step=1, limit=4
  $region2: #{discriminator_forward.4} parent=0 // loop_pre_header
    _
  $region3: #{discriminator_forward.4} parent=0 // loop_header
    %s10 = sphi 0, %s14
    %p11 = scmp.ge.s32.totalorder %s10, 4
    %s20 = sphi 0, %s22
    %s23 = sphi 0, %s20
    %s24 = sphi 0, %s23
    %s40 = sphi 0, %s24
    %s44 = sphi 0, %s44
    %s46 = sphi 0, %s44
    %s47 = sphi 0, %s46
    %s61 = sphi 0, %s47
    %s67 = sphi 0, %s69
    %s70 = sphi 0, %s67
    %s71 = sphi 0, %s70
    %s87 = sphi 0, %s71
    %s93 = sphi 0, %s95
    %s96 = sphi 0, %s93
    %s97 = sphi 0, %s96
    %s113 = sphi 0, %s97
  $region4: #{discriminator_forward.4} parent=0 // loop_header_branch
    %13 = sbr.rel (%p11) target = $region8
  $region5: #{discriminator_forward.4} parent=0 // loop_body
    %s15 = ssub.s32 %s10, 1
    %s16 = ssub.s32 %s10, 2
    %s17 = sadd.s32 %s10, 1
    %s18 = ssub.s32 %s10, %s17
    %p19 = scmp.eq.s32.totalorder %s18, 0
    %s21 = sadd.s32 %s20, 1
    %s22 = scalar_select %p19, %s20, %s21
    %p25 = pneg %p19
    %p26 = scmp.eq.s32.totalorder %s10, 1
    %p27 = por %p25, %p26
    %p28 = scmp.ne.s32.totalorder %s20, %s23
    %p29 = scmp.eq.s32.totalorder %s10, 0
    %p30 = por %p28, %p29
    %p31 = scmp.ne.s32.totalorder %s20, %s23
    %p32 = scmp.eq.s32.totalorder %s15, 1
    %p33 = por %p31, %p32
    %p34 = scmp.ne.s32.totalorder %s23, %s24
    %p35 = scmp.eq.s32.totalorder %s15, 0
    %p36 = por %p34, %p35
    %p37 = scmp.ne.s32.totalorder %s23, %s24
    %p38 = scmp.eq.s32.totalorder %s16, 1
    %p39 = por %p37, %p38
    %p41 = scmp.ne.s32.totalorder %s24, %s40
    %p42 = scmp.eq.s32.totalorder %s16, 0
    %p43 = por %p41, %p42
    %s45 = sadd.s32 %s44, 1
    %p48 = scmp.eq.s32.totalorder %s10, 1
    %p49 = scmp.ne.s32.totalorder %s44, %s46
    %p50 = scmp.eq.s32.totalorder %s10, 0
    %p51 = por %p49, %p50
    %p52 = scmp.ne.s32.totalorder %s44, %s46
    %p53 = scmp.eq.s32.totalorder %s15, 1
    %p54 = por %p52, %p53
    %p55 = scmp.ne.s32.totalorder %s46, %s47
    %p56 = scmp.eq.s32.totalorder %s15, 0
    %p57 = por %p55, %p56
    %p58 = scmp.ne.s32.totalorder %s46, %s47
    %p59 = scmp.eq.s32.totalorder %s16, 1
    %p60 = por %p58, %p59
    %p62 = scmp.ne.s32.totalorder %s47, %s61
    %p63 = scmp.eq.s32.totalorder %s16, 0
    %p64 = por %p62, %p63
    %s65 = ssub.s32 %s10, %s17
    %p66 = scmp.eq.s32.totalorder %s65, 0
    %s68 = sadd.s32 %s67, 1
    %s69 = scalar_select %p66, %s67, %s68
    %p72 = pneg %p66
    %p73 = scmp.eq.s32.totalorder %s10, 1
    %p74 = por %p72, %p73
    %p75 = scmp.ne.s32.totalorder %s67, %s70
    %p76 = scmp.eq.s32.totalorder %s10, 0
    %p77 = por %p75, %p76
    %p78 = scmp.ne.s32.totalorder %s67, %s70
    %p79 = scmp.eq.s32.totalorder %s15, 1
    %p80 = por %p78, %p79
    %p81 = scmp.ne.s32.totalorder %s70, %s71
    %p82 = scmp.eq.s32.totalorder %s15, 0
    %p83 = por %p81, %p82
    %p84 = scmp.ne.s32.totalorder %s70, %s71
    %p85 = scmp.eq.s32.totalorder %s16, 1
    %p86 = por %p84, %p85
    %p88 = scmp.ne.s32.totalorder %s71, %s87
    %p89 = scmp.eq.s32.totalorder %s16, 0
    %p90 = por %p88, %p89
    %s91 = ssub.s32 %s10, %s17
    %p92 = scmp.eq.s32.totalorder %s91, 0
    %s94 = sadd.s32 %s93, 1
    %s95 = scalar_select %p92, %s93, %s94
    %p98 = pneg %p92
    %p99 = scmp.eq.s32.totalorder %s10, 1
    %p100 = por %p98, %p99
    %p101 = scmp.ne.s32.totalorder %s93, %s96
    %p102 = scmp.eq.s32.totalorder %s10, 0
    %p103 = por %p101, %p102
    %p104 = scmp.ne.s32.totalorder %s93, %s96
    %p105 = scmp.eq.s32.totalorder %s15, 1
    %p106 = por %p104, %p105
    %p107 = scmp.ne.s32.totalorder %s96, %s97
    %p108 = scmp.eq.s32.totalorder %s15, 0
    %p109 = por %p107, %p108
    %p110 = scmp.ne.s32.totalorder %s96, %s97
    %p111 = scmp.eq.s32.totalorder %s16, 1
    %p112 = por %p110, %p111
    %p114 = scmp.ne.s32.totalorder %s97, %s113
    %p115 = scmp.eq.s32.totalorder %s16, 0
    %p116 = por %p114, %p115
    %p117 = scmp.le.s32.totalorder 1, %s10
    %p118 = scmp.lt.s32.totalorder %s10, 3
    %p119 = pnand %p117, %p118
    %p120 = pneg %p119
    // Predicated region
    $region9: #{discriminator_forward.4} parent=5 // pred_check
      _
    $region10: #{discriminator_forward.4} parent=5 // pred_check_branch
      %122 = sbr.rel (%p119) target = $region12
    $region11: #{discriminator_forward.4} parent=5 // pred_region
      %s123 = ssub.s32 %s10, 1
      // Predicated region
      $region13: #{discriminator_forward.4} parent=11 // pred_check
        %p124 = pneg %p57
      $region14: #{discriminator_forward.4} parent=11 // pred_check_branch
        %126 = sbr.rel (%p124) target = $region16
      $region15: #{discriminator_forward.4} parent=11 // pred_region
        _
      $region16: #{discriminator_forward.4} parent=11 // pred_fallthru
        _
    $region12: #{discriminator_forward.4} parent=5 // pred_fallthru
      _
    %p127 = scmp.lt.s32.totalorder %s10, 2
    // Predicated region
    $region17: #{discriminator_forward.4} parent=5 // pred_check
      %p128 = pneg %p127
    $region18: #{discriminator_forward.4} parent=5 // pred_check_branch
      %130 = sbr.rel (%p128) target = $region20
    $region19: #{discriminator_forward.4} parent=5 // pred_region
      // Predicated region
      $region21: #{discriminator_forward.4} parent=19 // pred_check
        %p131 = pneg %p30
      $region22: #{discriminator_forward.4} parent=19 // pred_check_branch
        %133 = sbr.rel (%p131) target = $region24
      $region23: #{discriminator_forward.4} parent=19 // pred_region
        %s134 = smul.u32 2, %s10
        %p135 = scmp.lt.s32.totalorder %s134, 3
        %s136 = scalar_select %p135, %s134, 3
        %s137 = smul.addr %s136, 16
        %s138 = smul.addr %s137, 4
        %s139 = scalar_lea.vmem %s0, %s138
        %s140 = smul.u32 2, %s10
      $region24: #{discriminator_forward.4} parent=19 // pred_fallthru
        _
    $region20: #{discriminator_forward.4} parent=5 // pred_fallthru
      _
    %p141 = scmp.le.s32.totalorder 1, %s10
    %p142 = scmp.lt.s32.totalorder %s10, 3
    %p143 = pnand %p141, %p142
    %p144 = pneg %p143
    // Predicated region
    $region25: #{discriminator_forward.4} parent=5 // pred_check
      _
    $region26: #{discriminator_forward.4} parent=5 // pred_check_branch
      %146 = sbr.rel (%p143) target = $region28
    $region27: #{discriminator_forward.4} parent=5 // pred_region
      %s147 = ssub.s32 %s10, 1
      %s148 = smul.u32 2, %s15
      %p149 = scmp.lt.s32.totalorder %s148, 3
      %s150 = scalar_select %p149, %s148, 3
      %s151 = smul.addr %s150, 16
      %s152 = smul.addr %s151, 4
      %s153 = scalar_lea.vmem %s0, %s152
      %p154 = pneg %p36
      %p155 = pneg %p33
      %p156 = pneg %p57
      %p157 = pneg %p54
      %p158 = pneg %p83
      %p159 = pneg %p80
      %s160 = smul.u32 2, %s15
      %p161 = scmp.lt.s32.totalorder %s160, 3
      %s162 = scalar_select %p161, %s160, 3
      %s163 = smul.addr %s162, 8
      %s164 = scalar_lea.vmem %s2, %s163
      %p165 = pneg %p109
      %p166 = pneg %p106
      %p167 = scmp.lt.s32.totalorder %s15, 1
      %s168 = scalar_select %p167, %s15, 1
      %s169 = smul.addr %s168, 8
      %s170 = scalar_lea.vmem %s3, %s169
      %s171 = smul.u32 2, %s15
      %p172 = scmp.lt.s32.totalorder %s171, 3
      %s173 = scalar_select %p172, %s171, 3
      %s174 = smul.addr %s173, 16
      %s175 = smul.addr %s174, 4
      %s176 = scalar_lea.vmem %s0, %s175
      %s177 = smul.u32 2, %s15
      %s178 = smul.u32 2, %s15
      %p179 = scmp.lt.s32.totalorder %s178, 3
      %s180 = scalar_select %p179, %s178, 3
      %s181 = smul.addr %s180, 8
      %s182 = scalar_lea.vmem %s2, %s181
      %s183 = smul.u32 2, %s15
      %p184 = scmp.lt.s32.totalorder %s15, 1
      %s185 = scalar_select %p184, %s15, 1
      %s186 = smul.addr %s185, 8
      %s187 = scalar_lea.vmem %s3, %s186
      %v188 = vld [vmem:[%s176] sm:$0xff]
      %v189 = vld [vmem:[%s176 + $0x8] sm:$0xff]
      %v190 = vld [vmem:[%s176 + $0x10] sm:$0xff]
      %v191 = vld [vmem:[%s176 + $0x18] sm:$0xff]
      %v192 = vld [vmem:[%s176 + $0x20] sm:$0xff]
      %v193 = vld [vmem:[%s176 + $0x28] sm:$0xff]
      %v194 = vld [vmem:[%s176 + $0x30] sm:$0xff]
      %v195 = vld [vmem:[%s176 + $0x38] sm:$0xff]
      %v196 = vld [vmem:[%s176 + $0x40] sm:$0xff]
      %v197 = vld [vmem:[%s176 + $0x48] sm:$0xff]
      %v198 = vld [vmem:[%s176 + $0x50] sm:$0xff]
      %v199 = vld [vmem:[%s176 + $0x58] sm:$0xff]
      %v200 = vld [vmem:[%s176 + $0x60] sm:$0xff]
      %v201 = vld [vmem:[%s176 + $0x68] sm:$0xff]
      %v202 = vld [vmem:[%s176 + $0x70] sm:$0xff]
      %v203 = vld [vmem:[%s176 + $0x78] sm:$0xff]
      %v204 = vld [vmem:[%s1] sm:$0xf]
      %v205 = vld [vmem:[%s1 + $0x4] sm:$0xf]
      %v206 = vld [vmem:[%s1 + $0x8] sm:$0xf]
      %v207 = vld [vmem:[%s1 + $0xc] sm:$0xf]
      %v208 = vld [vmem:[%s1 + $0x10] sm:$0xf]
      %v209 = vld [vmem:[%s1 + $0x14] sm:$0xf]
      %v210 = vld [vmem:[%s1 + $0x18] sm:$0xf]
      %v211 = vld [vmem:[%s1 + $0x1c] sm:$0xf]
      %v212 = vld [vmem:[%s1 + $0x20] sm:$0xf]
      %v213 = vld [vmem:[%s1 + $0x24] sm:$0xf]
      %v214 = vld [vmem:[%s1 + $0x28] sm:$0xf]
      %v215 = vld [vmem:[%s1 + $0x2c] sm:$0xf]
      %v216 = vld [vmem:[%s1 + $0x30] sm:$0xf]
      %v217 = vld [vmem:[%s1 + $0x34] sm:$0xf]
      %v218 = vld [vmem:[%s1 + $0x38] sm:$0xf]
      %v219 = vld [vmem:[%s1 + $0x3c] sm:$0xf]
      %v220 = vld [vmem:[%s1 + $0x40] sm:$0xf]
      %v221 = vld [vmem:[%s1 + $0x44] sm:$0xf]
      %v222 = vld [vmem:[%s1 + $0x48] sm:$0xf]
      %v223 = vld [vmem:[%s1 + $0x4c] sm:$0xf]
      %v224 = vld [vmem:[%s1 + $0x50] sm:$0xf]
      %v225 = vld [vmem:[%s1 + $0x54] sm:$0xf]
      %v226 = vld [vmem:[%s1 + $0x58] sm:$0xf]
      %v227 = vld [vmem:[%s1 + $0x5c] sm:$0xf]
      %v228 = vld [vmem:[%s1 + $0x60] sm:$0xf]
      %v229 = vld [vmem:[%s1 + $0x64] sm:$0xf]
      %v230 = vld [vmem:[%s1 + $0x68] sm:$0xf]
      %v231 = vld [vmem:[%s1 + $0x6c] sm:$0xf]
      %v232 = vld [vmem:[%s1 + $0x70] sm:$0xf]
      %v233 = vld [vmem:[%s1 + $0x74] sm:$0xf]
      %v234 = vld [vmem:[%s1 + $0x78] sm:$0xf]
      %v235 = vld [vmem:[%s1 + $0x7c] sm:$0xf]
      %v236 = vld [vmem:[%s1 + $0x80] sm:$0xf]
      %v237 = vld [vmem:[%s1 + $0x84] sm:$0xf]
      %v238 = vld [vmem:[%s1 + $0x88] sm:$0xf]
      %v239 = vld [vmem:[%s1 + $0x8c] sm:$0xf]
      %v240 = vld [vmem:[%s1 + $0x90] sm:$0xf]
      %v241 = vld [vmem:[%s1 + $0x94] sm:$0xf]
      %v242 = vld [vmem:[%s1 + $0x98] sm:$0xf]
      %v243 = vld [vmem:[%s1 + $0x9c] sm:$0xf]
      %v244 = vld [vmem:[%s1 + $0xa0] sm:$0xf]
      %v245 = vld [vmem:[%s1 + $0xa4] sm:$0xf]
      %v246 = vld [vmem:[%s1 + $0xa8] sm:$0xf]
      %v247 = vld [vmem:[%s1 + $0xac] sm:$0xf]
      %v248 = vld [vmem:[%s1 + $0xb0] sm:$0xf]
      %v249 = vld [vmem:[%s1 + $0xb4] sm:$0xf]
      %v250 = vld [vmem:[%s1 + $0xb8] sm:$0xf]
      %v251 = vld [vmem:[%s1 + $0xbc] sm:$0xf]
      %v252 = vld [vmem:[%s1 + $0xc0] sm:$0xf]
      %v253 = vld [vmem:[%s1 + $0xc4] sm:$0xf]
      %v254 = vld [vmem:[%s1 + $0xc8] sm:$0xf]
      %v255 = vld [vmem:[%s1 + $0xcc] sm:$0xf]
      %v256 = vld [vmem:[%s1 + $0xd0] sm:$0xf]
      %v257 = vld [vmem:[%s1 + $0xd4] sm:$0xf]
      %v258 = vld [vmem:[%s1 + $0xd8] sm:$0xf]
      %v259 = vld [vmem:[%s1 + $0xdc] sm:$0xf]
      %v260 = vld [vmem:[%s1 + $0xe0] sm:$0xf]
      %v261 = vld [vmem:[%s1 + $0xe4] sm:$0xf]
      %v262 = vld [vmem:[%s1 + $0xe8] sm:$0xf]
      %v263 = vld [vmem:[%s1 + $0xec] sm:$0xf]
      %v264 = vld [vmem:[%s1 + $0xf0] sm:$0xf]
      %v265 = vld [vmem:[%s1 + $0xf4] sm:$0xf]
      %v266 = vld [vmem:[%s1 + $0xf8] sm:$0xf]
      %v267 = vld [vmem:[%s1 + $0xfc] sm:$0xf]
      %v268 = vld [vmem:[%s1 + $0x100] sm:$0xf]
      %v269 = vld [vmem:[%s1 + $0x104] sm:$0xf]
      %v270 = vld [vmem:[%s1 + $0x108] sm:$0xf]
      %v271 = vld [vmem:[%s1 + $0x10c] sm:$0xf]
      %v272 = vld [vmem:[%s1 + $0x110] sm:$0xf]
      %v273 = vld [vmem:[%s1 + $0x114] sm:$0xf]
      %v274 = vld [vmem:[%s1 + $0x118] sm:$0xf]
      %v275 = vld [vmem:[%s1 + $0x11c] sm:$0xf]
      %v276 = vld [vmem:[%s1 + $0x120] sm:$0xf]
      %v277 = vld [vmem:[%s1 + $0x124] sm:$0xf]
      %v278 = vld [vmem:[%s1 + $0x128] sm:$0xf]
      %v279 = vld [vmem:[%s1 + $0x12c] sm:$0xf]
      %v280 = vld [vmem:[%s1 + $0x130] sm:$0xf]
      %v281 = vld [vmem:[%s1 + $0x134] sm:$0xf]
      %v282 = vld [vmem:[%s1 + $0x138] sm:$0xf]
      %v283 = vld [vmem:[%s1 + $0x13c] sm:$0xf]
      %v284 = vld [vmem:[%s1 + $0x140] sm:$0xf]
      %v285 = vld [vmem:[%s1 + $0x144] sm:$0xf]
      %v286 = vld [vmem:[%s1 + $0x148] sm:$0xf]
      %v287 = vld [vmem:[%s1 + $0x14c] sm:$0xf]
      %v288 = vld [vmem:[%s1 + $0x150] sm:$0xf]
      %v289 = vld [vmem:[%s1 + $0x154] sm:$0xf]
      %v290 = vld [vmem:[%s1 + $0x158] sm:$0xf]
      %v291 = vld [vmem:[%s1 + $0x15c] sm:$0xf]
      %v292 = vld [vmem:[%s1 + $0x160] sm:$0xf]
      %v293 = vld [vmem:[%s1 + $0x164] sm:$0xf]
      %v294 = vld [vmem:[%s1 + $0x168] sm:$0xf]
      %v295 = vld [vmem:[%s1 + $0x16c] sm:$0xf]
      %v296 = vld [vmem:[%s1 + $0x170] sm:$0xf]
      %v297 = vld [vmem:[%s1 + $0x174] sm:$0xf]
      %v298 = vld [vmem:[%s1 + $0x178] sm:$0xf]
      %v299 = vld [vmem:[%s1 + $0x17c] sm:$0xf]
      %v300 = vld [vmem:[%s1 + $0x180] sm:$0xf]
      %v301 = vld [vmem:[%s1 + $0x184] sm:$0xf]
      %v302 = vld [vmem:[%s1 + $0x188] sm:$0xf]
      %v303 = vld [vmem:[%s1 + $0x18c] sm:$0xf]
      %v304 = vld [vmem:[%s1 + $0x190] sm:$0xf]
      %v305 = vld [vmem:[%s1 + $0x194] sm:$0xf]
      %v306 = vld [vmem:[%s1 + $0x198] sm:$0xf]
      %v307 = vld [vmem:[%s1 + $0x19c] sm:$0xf]
      %v308 = vld [vmem:[%s1 + $0x1a0] sm:$0xf]
      %v309 = vld [vmem:[%s1 + $0x1a4] sm:$0xf]
      %v310 = vld [vmem:[%s1 + $0x1a8] sm:$0xf]
      %v311 = vld [vmem:[%s1 + $0x1ac] sm:$0xf]
      %v312 = vld [vmem:[%s1 + $0x1b0] sm:$0xf]
      %v313 = vld [vmem:[%s1 + $0x1b4] sm:$0xf]
      %v314 = vld [vmem:[%s1 + $0x1b8] sm:$0xf]
      %v315 = vld [vmem:[%s1 + $0x1bc] sm:$0xf]
      %v316 = vld [vmem:[%s1 + $0x1c0] sm:$0xf]
      %v317 = vld [vmem:[%s1 + $0x1c4] sm:$0xf]
      %v318 = vld [vmem:[%s1 + $0x1c8] sm:$0xf]
      %v319 = vld [vmem:[%s1 + $0x1cc] sm:$0xf]
      %v320 = vld [vmem:[%s1 + $0x1d0] sm:$0xf]
      %v321 = vld [vmem:[%s1 + $0x1d4] sm:$0xf]
      %v322 = vld [vmem:[%s1 + $0x1d8] sm:$0xf]
      %v323 = vld [vmem:[%s1 + $0x1dc] sm:$0xf]
      %v324 = vld [vmem:[%s1 + $0x1e0] sm:$0xf]
      %v325 = vld [vmem:[%s1 + $0x1e4] sm:$0xf]
      %v326 = vld [vmem:[%s1 + $0x1e8] sm:$0xf]
      %v327 = vld [vmem:[%s1 + $0x1ec] sm:$0xf]
      %v328 = vld [vmem:[%s1 + $0x1f0] sm:$0xf]
      %v329 = vld [vmem:[%s1 + $0x1f4] sm:$0xf]
      %v330 = vld [vmem:[%s1 + $0x1f8] sm:$0xf]
      %v331 = vld [vmem:[%s1 + $0x1fc] sm:$0xf]
      %v332 = vld [vmem:[%s1 + $0x200] sm:$0xf]
      %v333 = vld [vmem:[%s1 + $0x204] sm:$0xf]
      %v334 = vld [vmem:[%s1 + $0x208] sm:$0xf]
      %v335 = vld [vmem:[%s1 + $0x20c] sm:$0xf]
      %v336 = vld [vmem:[%s1 + $0x210] sm:$0xf]
      %v337 = vld [vmem:[%s1 + $0x214] sm:$0xf]
      %v338 = vld [vmem:[%s1 + $0x218] sm:$0xf]
      %v339 = vld [vmem:[%s1 + $0x21c] sm:$0xf]
      %v340 = vld [vmem:[%s1 + $0x220] sm:$0xf]
      %v341 = vld [vmem:[%s1 + $0x224] sm:$0xf]
      %v342 = vld [vmem:[%s1 + $0x228] sm:$0xf]
      %v343 = vld [vmem:[%s1 + $0x22c] sm:$0xf]
      %v344 = vld [vmem:[%s1 + $0x230] sm:$0xf]
      %v345 = vld [vmem:[%s1 + $0x234] sm:$0xf]
      %v346 = vld [vmem:[%s1 + $0x238] sm:$0xf]
      %v347 = vld [vmem:[%s1 + $0x23c] sm:$0xf]
      %v348 = vld [vmem:[%s1 + $0x240] sm:$0xf]
      %v349 = vld [vmem:[%s1 + $0x244] sm:$0xf]
      %v350 = vld [vmem:[%s1 + $0x248] sm:$0xf]
      %v351 = vld [vmem:[%s1 + $0x24c] sm:$0xf]
      %v352 = vld [vmem:[%s1 + $0x250] sm:$0xf]
      %v353 = vld [vmem:[%s1 + $0x254] sm:$0xf]
      %v354 = vld [vmem:[%s1 + $0x258] sm:$0xf]
      %v355 = vld [vmem:[%s1 + $0x25c] sm:$0xf]
      %v356 = vld [vmem:[%s1 + $0x260] sm:$0xf]
      %v357 = vld [vmem:[%s1 + $0x264] sm:$0xf]
      %v358 = vld [vmem:[%s1 + $0x268] sm:$0xf]
      %v359 = vld [vmem:[%s1 + $0x26c] sm:$0xf]
      %v360 = vld [vmem:[%s1 + $0x270] sm:$0xf]
      %v361 = vld [vmem:[%s1 + $0x274] sm:$0xf]
      %v362 = vld [vmem:[%s1 + $0x278] sm:$0xf]
      %v363 = vld [vmem:[%s1 + $0x27c] sm:$0xf]
      %v364 = vld [vmem:[%s1 + $0x280] sm:$0xf]
      %v365 = vld [vmem:[%s1 + $0x284] sm:$0xf]
      %v366 = vld [vmem:[%s1 + $0x288] sm:$0xf]
      %v367 = vld [vmem:[%s1 + $0x28c] sm:$0xf]
      %v368 = vld [vmem:[%s1 + $0x290] sm:$0xf]
      %v369 = vld [vmem:[%s1 + $0x294] sm:$0xf]
      %v370 = vld [vmem:[%s1 + $0x298] sm:$0xf]
      %v371 = vld [vmem:[%s1 + $0x29c] sm:$0xf]
      %v372 = vld [vmem:[%s1 + $0x2a0] sm:$0xf]
      %v373 = vld [vmem:[%s1 + $0x2a4] sm:$0xf]
      %v374 = vld [vmem:[%s1 + $0x2a8] sm:$0xf]
      %v375 = vld [vmem:[%s1 + $0x2ac] sm:$0xf]
      %v376 = vld [vmem:[%s1 + $0x2b0] sm:$0xf]
      %v377 = vld [vmem:[%s1 + $0x2b4] sm:$0xf]
      %v378 = vld [vmem:[%s1 + $0x2b8] sm:$0xf]
      %v379 = vld [vmem:[%s1 + $0x2bc] sm:$0xf]
      %v380 = vld [vmem:[%s1 + $0x2c0] sm:$0xf]
      %v381 = vld [vmem:[%s1 + $0x2c4] sm:$0xf]
      %v382 = vld [vmem:[%s1 + $0x2c8] sm:$0xf]
      %v383 = vld [vmem:[%s1 + $0x2cc] sm:$0xf]
      %v384 = vld [vmem:[%s1 + $0x2d0] sm:$0xf]
      %v385 = vld [vmem:[%s1 + $0x2d4] sm:$0xf]
      %v386 = vld [vmem:[%s1 + $0x2d8] sm:$0xf]
      %v387 = vld [vmem:[%s1 + $0x2dc] sm:$0xf]
      %v388 = vld [vmem:[%s1 + $0x2e0] sm:$0xf]
      %v389 = vld [vmem:[%s1 + $0x2e4] sm:$0xf]
      %v390 = vld [vmem:[%s1 + $0x2e8] sm:$0xf]
      %v391 = vld [vmem:[%s1 + $0x2ec] sm:$0xf]
      %v392 = vld [vmem:[%s1 + $0x2f0] sm:$0xf]
      %v393 = vld [vmem:[%s1 + $0x2f4] sm:$0xf]
      %v394 = vld [vmem:[%s1 + $0x2f8] sm:$0xf]
      %v395 = vld [vmem:[%s1 + $0x2fc] sm:$0xf]
      %v396 = vld [vmem:[%s1 + $0x300] sm:$0xf]
      %v397 = vld [vmem:[%s1 + $0x304] sm:$0xf]
      %v398 = vld [vmem:[%s1 + $0x308] sm:$0xf]
      %v399 = vld [vmem:[%s1 + $0x30c] sm:$0xf]
      %v400 = vld [vmem:[%s1 + $0x310] sm:$0xf]
      %v401 = vld [vmem:[%s1 + $0x314] sm:$0xf]
      %v402 = vld [vmem:[%s1 + $0x318] sm:$0xf]
      %v403 = vld [vmem:[%s1 + $0x31c] sm:$0xf]
      %v404 = vld [vmem:[%s1 + $0x320] sm:$0xf]
      %v405 = vld [vmem:[%s1 + $0x324] sm:$0xf]
      %v406 = vld [vmem:[%s1 + $0x328] sm:$0xf]
      %v407 = vld [vmem:[%s1 + $0x32c] sm:$0xf]
      %v408 = vld [vmem:[%s1 + $0x330] sm:$0xf]
      %v409 = vld [vmem:[%s1 + $0x334] sm:$0xf]
      %v410 = vld [vmem:[%s1 + $0x338] sm:$0xf]
      %v411 = vld [vmem:[%s1 + $0x33c] sm:$0xf]
      %v412 = vld [vmem:[%s1 + $0x340] sm:$0xf]
      %v413 = vld [vmem:[%s1 + $0x344] sm:$0xf]
      %v414 = vld [vmem:[%s1 + $0x348] sm:$0xf]
      %v415 = vld [vmem:[%s1 + $0x34c] sm:$0xf]
      %v416 = vld [vmem:[%s1 + $0x350] sm:$0xf]
      %v417 = vld [vmem:[%s1 + $0x354] sm:$0xf]
      %v418 = vld [vmem:[%s1 + $0x358] sm:$0xf]
      %v419 = vld [vmem:[%s1 + $0x35c] sm:$0xf]
      %v420 = vld [vmem:[%s1 + $0x360] sm:$0xf]
      %v421 = vld [vmem:[%s1 + $0x364] sm:$0xf]
      %v422 = vld [vmem:[%s1 + $0x368] sm:$0xf]
      %v423 = vld [vmem:[%s1 + $0x36c] sm:$0xf]
      %v424 = vld [vmem:[%s1 + $0x370] sm:$0xf]
      %v425 = vld [vmem:[%s1 + $0x374] sm:$0xf]
      %v426 = vld [vmem:[%s1 + $0x378] sm:$0xf]
      %v427 = vld [vmem:[%s1 + $0x37c] sm:$0xf]
      %v428 = vld [vmem:[%s1 + $0x380] sm:$0xf]
      %v429 = vld [vmem:[%s1 + $0x384] sm:$0xf]
      %v430 = vld [vmem:[%s1 + $0x388] sm:$0xf]
      %v431 = vld [vmem:[%s1 + $0x38c] sm:$0xf]
      %v432 = vld [vmem:[%s1 + $0x390] sm:$0xf]
      %v433 = vld [vmem:[%s1 + $0x394] sm:$0xf]
      %v434 = vld [vmem:[%s1 + $0x398] sm:$0xf]
      %v435 = vld [vmem:[%s1 + $0x39c] sm:$0xf]
      %v436 = vld [vmem:[%s1 + $0x3a0] sm:$0xf]
      %v437 = vld [vmem:[%s1 + $0x3a4] sm:$0xf]
      %v438 = vld [vmem:[%s1 + $0x3a8] sm:$0xf]
      %v439 = vld [vmem:[%s1 + $0x3ac] sm:$0xf]
      %v440 = vld [vmem:[%s1 + $0x3b0] sm:$0xf]
      %v441 = vld [vmem:[%s1 + $0x3b4] sm:$0xf]
      %v442 = vld [vmem:[%s1 + $0x3b8] sm:$0xf]
      %v443 = vld [vmem:[%s1 + $0x3bc] sm:$0xf]
      %v444 = vld [vmem:[%s1 + $0x3c0] sm:$0xf]
      %v445 = vld [vmem:[%s1 + $0x3c4] sm:$0xf]
      %v446 = vld [vmem:[%s1 + $0x3c8] sm:$0xf]
      %v447 = vld [vmem:[%s1 + $0x3cc] sm:$0xf]
      %v448 = vld [vmem:[%s1 + $0x3d0] sm:$0xf]
      %v449 = vld [vmem:[%s1 + $0x3d4] sm:$0xf]
      %v450 = vld [vmem:[%s1 + $0x3d8] sm:$0xf]
      %v451 = vld [vmem:[%s1 + $0x3dc] sm:$0xf]
      %v452 = vld [vmem:[%s1 + $0x3e0] sm:$0xf]
      %v453 = vld [vmem:[%s1 + $0x3e4] sm:$0xf]
      %v454 = vld [vmem:[%s1 + $0x3e8] sm:$0xf]
      %v455 = vld [vmem:[%s1 + $0x3ec] sm:$0xf]
      %v456 = vld [vmem:[%s1 + $0x3f0] sm:$0xf]
      %v457 = vld [vmem:[%s1 + $0x3f4] sm:$0xf]
      %v458 = vld [vmem:[%s1 + $0x3f8] sm:$0xf]
      %v459 = vld [vmem:[%s1 + $0x3fc] sm:$0xf]
      %v476 = vunpack.c.l.b16 %v188
      %v477 = vunpack.c.h.b16 %v188
      %v478 = vunpack.c.l.b16 %v189
      %v479 = vunpack.c.h.b16 %v189
      %v480 = vunpack.c.l.b16 %v190
      %v481 = vunpack.c.h.b16 %v190
      %v482 = vunpack.c.l.b16 %v191
      %v483 = vunpack.c.h.b16 %v191
      %v484 = vunpack.c.l.b16 %v192
      %v485 = vunpack.c.h.b16 %v192
      %v486 = vunpack.c.l.b16 %v193
      %v487 = vunpack.c.h.b16 %v193
      %v488 = vunpack.c.l.b16 %v194
      %v489 = vunpack.c.h.b16 %v194
      %v490 = vunpack.c.l.b16 %v195
      %v491 = vunpack.c.h.b16 %v195
      %v492 = vunpack.c.l.b16 %v196
      %v493 = vunpack.c.h.b16 %v196
      %v494 = vunpack.c.l.b16 %v197
      %v495 = vunpack.c.h.b16 %v197
      %v496 = vunpack.c.l.b16 %v198
      %v497 = vunpack.c.h.b16 %v198
      %v498 = vunpack.c.l.b16 %v199
      %v499 = vunpack.c.h.b16 %v199
      %v500 = vunpack.c.l.b16 %v200
      %v501 = vunpack.c.h.b16 %v200
      %v502 = vunpack.c.l.b16 %v201
      %v503 = vunpack.c.h.b16 %v201
      %v504 = vunpack.c.l.b16 %v202
      %v505 = vunpack.c.h.b16 %v202
      %v506 = vunpack.c.l.b16 %v203
      %v507 = vunpack.c.h.b16 %v203
      %v508 = vpack.c.b16 %v492, %v476
      %v509 = vpack.c.b16 %v493, %v477
      %v510 = vpack.c.b16 %v494, %v478
      %v511 = vpack.c.b16 %v495, %v479
      %v512 = vpack.c.b16 %v496, %v480
      %v513 = vpack.c.b16 %v497, %v481
      %v514 = vpack.c.b16 %v498, %v482
      %v515 = vpack.c.b16 %v499, %v483
      %v516 = vpack.c.b16 %v500, %v484
      %v517 = vpack.c.b16 %v501, %v485
      %v518 = vpack.c.b16 %v502, %v486
      %v519 = vpack.c.b16 %v503, %v487
      %v520 = vpack.c.b16 %v504, %v488
      %v521 = vpack.c.b16 %v505, %v489
      %v522 = vpack.c.b16 %v506, %v490
      %v523 = vpack.c.b16 %v507, %v491
      %v796 = vunpack.c.l.b16 %v204
      %v797 = vunpack.c.l.b16 %v205
      %v798 = vunpack.c.l.b16 %v206
      %v799 = vunpack.c.l.b16 %v207
      %v800 = vunpack.c.l.b16 %v208
      %v801 = vunpack.c.l.b16 %v209
      %v802 = vunpack.c.l.b16 %v210
      %v803 = vunpack.c.l.b16 %v211
      %v804 = vunpack.c.l.b16 %v212
      %v805 = vunpack.c.l.b16 %v213
      %v806 = vunpack.c.l.b16 %v214
      %v807 = vunpack.c.l.b16 %v215
      %v808 = vunpack.c.l.b16 %v216
      %v809 = vunpack.c.l.b16 %v217
      %v810 = vunpack.c.l.b16 %v218
      %v811 = vunpack.c.l.b16 %v219
      %v812 = vunpack.c.l.b16 %v220
      %v813 = vunpack.c.l.b16 %v221
      %v814 = vunpack.c.l.b16 %v222
      %v815 = vunpack.c.l.b16 %v223
      %v816 = vunpack.c.l.b16 %v224
      %v817 = vunpack.c.l.b16 %v225
      %v818 = vunpack.c.l.b16 %v226
      %v819 = vunpack.c.l.b16 %v227
      %v820 = vunpack.c.l.b16 %v228
      %v821 = vunpack.c.l.b16 %v229
      %v822 = vunpack.c.l.b16 %v230
      %v823 = vunpack.c.l.b16 %v231
      %v824 = vunpack.c.l.b16 %v232
      %v825 = vunpack.c.l.b16 %v233
      %v826 = vunpack.c.l.b16 %v234
      %v827 = vunpack.c.l.b16 %v235
      %v828 = vunpack.c.l.b16 %v236
      %v829 = vunpack.c.l.b16 %v237
      %v830 = vunpack.c.l.b16 %v238
      %v831 = vunpack.c.l.b16 %v239
      %v832 = vunpack.c.l.b16 %v240
      %v833 = vunpack.c.l.b16 %v241
      %v834 = vunpack.c.l.b16 %v242
      %v835 = vunpack.c.l.b16 %v243
      %v836 = vunpack.c.l.b16 %v244
      %v837 = vunpack.c.l.b16 %v245
      %v838 = vunpack.c.l.b16 %v246
      %v839 = vunpack.c.l.b16 %v247
      %v840 = vunpack.c.l.b16 %v248
      %v841 = vunpack.c.l.b16 %v249
      %v842 = vunpack.c.l.b16 %v250
      %v843 = vunpack.c.l.b16 %v251
      %v844 = vunpack.c.l.b16 %v252
      %v845 = vunpack.c.l.b16 %v253
      %v846 = vunpack.c.l.b16 %v254
      %v847 = vunpack.c.l.b16 %v255
      %v848 = vunpack.c.l.b16 %v256
      %v849 = vunpack.c.l.b16 %v257
      %v850 = vunpack.c.l.b16 %v258
      %v851 = vunpack.c.l.b16 %v259
      %v852 = vunpack.c.l.b16 %v260
      %v853 = vunpack.c.l.b16 %v261
      %v854 = vunpack.c.l.b16 %v262
      %v855 = vunpack.c.l.b16 %v263
      %v856 = vunpack.c.l.b16 %v264
      %v857 = vunpack.c.l.b16 %v265
      %v858 = vunpack.c.l.b16 %v266
      %v859 = vunpack.c.l.b16 %v267
      %v860 = vunpack.c.l.b16 %v268
      %v861 = vunpack.c.l.b16 %v269
      %v862 = vunpack.c.l.b16 %v270
      %v863 = vunpack.c.l.b16 %v271
      %v864 = vunpack.c.l.b16 %v272
      %v865 = vunpack.c.l.b16 %v273
      %v866 = vunpack.c.l.b16 %v274
      %v867 = vunpack.c.l.b16 %v275
      %v868 = vunpack.c.l.b16 %v276
      %v869 = vunpack.c.l.b16 %v277
      %v870 = vunpack.c.l.b16 %v278
      %v871 = vunpack.c.l.b16 %v279
      %v872 = vunpack.c.l.b16 %v280
      %v873 = vunpack.c.l.b16 %v281
      %v874 = vunpack.c.l.b16 %v282
      %v875 = vunpack.c.l.b16 %v283
      %v876 = vunpack.c.l.b16 %v284
      %v877 = vunpack.c.l.b16 %v285
      %v878 = vunpack.c.l.b16 %v286
      %v879 = vunpack.c.l.b16 %v287
      %v880 = vunpack.c.l.b16 %v288
      %v881 = vunpack.c.l.b16 %v289
      %v882 = vunpack.c.l.b16 %v290
      %v883 = vunpack.c.l.b16 %v291
      %v884 = vunpack.c.l.b16 %v292
      %v885 = vunpack.c.l.b16 %v293
      %v886 = vunpack.c.l.b16 %v294
      %v887 = vunpack.c.l.b16 %v295
      %v888 = vunpack.c.l.b16 %v296
      %v889 = vunpack.c.l.b16 %v297
      %v890 = vunpack.c.l.b16 %v298
      %v891 = vunpack.c.l.b16 %v299
      %v892 = vunpack.c.l.b16 %v300
      %v893 = vunpack.c.l.b16 %v301
      %v894 = vunpack.c.l.b16 %v302
      %v895 = vunpack.c.l.b16 %v303
      %v896 = vunpack.c.l.b16 %v304
      %v897 = vunpack.c.l.b16 %v305
      %v898 = vunpack.c.l.b16 %v306
      %v899 = vunpack.c.l.b16 %v307
      %v900 = vunpack.c.l.b16 %v308
      %v901 = vunpack.c.l.b16 %v309
      %v902 = vunpack.c.l.b16 %v310
      %v903 = vunpack.c.l.b16 %v311
      %v904 = vunpack.c.l.b16 %v312
      %v905 = vunpack.c.l.b16 %v313
      %v906 = vunpack.c.l.b16 %v314
      %v907 = vunpack.c.l.b16 %v315
      %v908 = vunpack.c.l.b16 %v316
      %v909 = vunpack.c.l.b16 %v317
      %v910 = vunpack.c.l.b16 %v318
      %v911 = vunpack.c.l.b16 %v319
      %v912 = vunpack.c.l.b16 %v320
      %v913 = vunpack.c.l.b16 %v321
      %v914 = vunpack.c.l.b16 %v322
      %v915 = vunpack.c.l.b16 %v323
      %v916 = vunpack.c.l.b16 %v324
      %v917 = vunpack.c.l.b16 %v325
      %v918 = vunpack.c.l.b16 %v326
      %v919 = vunpack.c.l.b16 %v327
      %v920 = vunpack.c.l.b16 %v328
      %v921 = vunpack.c.l.b16 %v329
      %v922 = vunpack.c.l.b16 %v330
      %v923 = vunpack.c.l.b16 %v331
      %v924 = vunpack.c.l.b16 %v332
      %v925 = vunpack.c.l.b16 %v333
      %v926 = vunpack.c.l.b16 %v334
      %v927 = vunpack.c.l.b16 %v335
      %v928 = vunpack.c.l.b16 %v336
      %v929 = vunpack.c.l.b16 %v337
      %v930 = vunpack.c.l.b16 %v338
      %v931 = vunpack.c.l.b16 %v339
      %v932 = vunpack.c.l.b16 %v340
      %v933 = vunpack.c.l.b16 %v341
      %v934 = vunpack.c.l.b16 %v342
      %v935 = vunpack.c.l.b16 %v343
      %v936 = vunpack.c.l.b16 %v344
      %v937 = vunpack.c.l.b16 %v345
      %v938 = vunpack.c.l.b16 %v346
      %v939 = vunpack.c.l.b16 %v347
      %v940 = vunpack.c.l.b16 %v348
      %v941 = vunpack.c.l.b16 %v349
      %v942 = vunpack.c.l.b16 %v350
      %v943 = vunpack.c.l.b16 %v351
      %v944 = vunpack.c.l.b16 %v352
      %v945 = vunpack.c.l.b16 %v353
      %v946 = vunpack.c.l.b16 %v354
      %v947 = vunpack.c.l.b16 %v355
      %v948 = vunpack.c.l.b16 %v356
      %v949 = vunpack.c.l.b16 %v357
      %v950 = vunpack.c.l.b16 %v358
      %v951 = vunpack.c.l.b16 %v359
      %v952 = vunpack.c.l.b16 %v360
      %v953 = vunpack.c.l.b16 %v361
      %v954 = vunpack.c.l.b16 %v362
      %v955 = vunpack.c.l.b16 %v363
      %v956 = vunpack.c.l.b16 %v364
      %v957 = vunpack.c.l.b16 %v365
      %v958 = vunpack.c.l.b16 %v366
      %v959 = vunpack.c.l.b16 %v367
      %v960 = vunpack.c.l.b16 %v368
      %v961 = vunpack.c.l.b16 %v369
      %v962 = vunpack.c.l.b16 %v370
      %v963 = vunpack.c.l.b16 %v371
      %v964 = vunpack.c.l.b16 %v372
      %v965 = vunpack.c.l.b16 %v373
      %v966 = vunpack.c.l.b16 %v374
      %v967 = vunpack.c.l.b16 %v375
      %v968 = vunpack.c.l.b16 %v376
      %v969 = vunpack.c.l.b16 %v377
      %v970 = vunpack.c.l.b16 %v378
      %v971 = vunpack.c.l.b16 %v379
      %v972 = vunpack.c.l.b16 %v380
      %v973 = vunpack.c.l.b16 %v381
      %v974 = vunpack.c.l.b16 %v382
      %v975 = vunpack.c.l.b16 %v383
      %v976 = vunpack.c.l.b16 %v384
      %v977 = vunpack.c.l.b16 %v385
      %v978 = vunpack.c.l.b16 %v386
      %v979 = vunpack.c.l.b16 %v387
      %v980 = vunpack.c.l.b16 %v388
      %v981 = vunpack.c.l.b16 %v389
      %v982 = vunpack.c.l.b16 %v390
      %v983 = vunpack.c.l.b16 %v391
      %v984 = vunpack.c.l.b16 %v392
      %v985 = vunpack.c.l.b16 %v393
      %v986 = vunpack.c.l.b16 %v394
      %v987 = vunpack.c.l.b16 %v395
      %v988 = vunpack.c.l.b16 %v396
      %v989 = vunpack.c.l.b16 %v397
      %v990 = vunpack.c.l.b16 %v398
      %v991 = vunpack.c.l.b16 %v399
      %v992 = vunpack.c.l.b16 %v400
      %v993 = vunpack.c.l.b16 %v401
      %v994 = vunpack.c.l.b16 %v402
      %v995 = vunpack.c.l.b16 %v403
      %v996 = vunpack.c.l.b16 %v404
      %v997 = vunpack.c.l.b16 %v405
      %v998 = vunpack.c.l.b16 %v406
      %v999 = vunpack.c.l.b16 %v407
      %v1000 = vunpack.c.l.b16 %v408
      %v1001 = vunpack.c.l.b16 %v409
      %v1002 = vunpack.c.l.b16 %v410
      %v1003 = vunpack.c.l.b16 %v411
      %v1004 = vunpack.c.l.b16 %v412
      %v1005 = vunpack.c.l.b16 %v413
      %v1006 = vunpack.c.l.b16 %v414
      %v1007 = vunpack.c.l.b16 %v415
      %v1008 = vunpack.c.l.b16 %v416
      %v1009 = vunpack.c.l.b16 %v417
      %v1010 = vunpack.c.l.b16 %v418
      %v1011 = vunpack.c.l.b16 %v419
      %v1012 = vunpack.c.l.b16 %v420
      %v1013 = vunpack.c.l.b16 %v421
      %v1014 = vunpack.c.l.b16 %v422
      %v1015 = vunpack.c.l.b16 %v423
      %v1016 = vunpack.c.l.b16 %v424
      %v1017 = vunpack.c.l.b16 %v425
      %v1018 = vunpack.c.l.b16 %v426
      %v1019 = vunpack.c.l.b16 %v427
      %v1020 = vunpack.c.l.b16 %v428
      %v1021 = vunpack.c.l.b16 %v429
      %v1022 = vunpack.c.l.b16 %v430
      %v1023 = vunpack.c.l.b16 %v431
      %v1024 = vunpack.c.l.b16 %v432
      %v1025 = vunpack.c.l.b16 %v433
      %v1026 = vunpack.c.l.b16 %v434
      %v1027 = vunpack.c.l.b16 %v435
      %v1028 = vunpack.c.l.b16 %v436
      %v1029 = vunpack.c.l.b16 %v437
      %v1030 = vunpack.c.l.b16 %v438
      %v1031 = vunpack.c.l.b16 %v439
      %v1032 = vunpack.c.l.b16 %v440
      %v1033 = vunpack.c.l.b16 %v441
      %v1034 = vunpack.c.l.b16 %v442
      %v1035 = vunpack.c.l.b16 %v443
      %v1036 = vunpack.c.l.b16 %v444
      %v1037 = vunpack.c.l.b16 %v445
      %v1038 = vunpack.c.l.b16 %v446
      %v1039 = vunpack.c.l.b16 %v447
      %v1040 = vunpack.c.l.b16 %v448
      %v1041 = vunpack.c.l.b16 %v449
      %v1042 = vunpack.c.l.b16 %v450
      %v1043 = vunpack.c.l.b16 %v451
      %v1044 = vunpack.c.l.b16 %v452
      %v1045 = vunpack.c.l.b16 %v453
      %v1046 = vunpack.c.l.b16 %v454
      %v1047 = vunpack.c.l.b16 %v455
      %v1048 = vunpack.c.l.b16 %v456
      %v1049 = vunpack.c.l.b16 %v457
      %v1050 = vunpack.c.l.b16 %v458
      %v1051 = vunpack.c.l.b16 %v459
      %v1052 = vpack.c.b16 %v797, %v796
      %v1053 = vpack.c.b16 %v799, %v798
      %v1054 = vpack.c.b16 %v801, %v800
      %v1055 = vpack.c.b16 %v803, %v802
      %v1056 = vpack.c.b16 %v805, %v804
      %v1057 = vpack.c.b16 %v807, %v806
      %v1058 = vpack.c.b16 %v809, %v808
      %v1059 = vpack.c.b16 %v811, %v810
      %v1060 = vpack.c.b16 %v813, %v812
      %v1061 = vpack.c.b16 %v815, %v814
      %v1062 = vpack.c.b16 %v817, %v816
      %v1063 = vpack.c.b16 %v819, %v818
      %v1064 = vpack.c.b16 %v821, %v820
      %v1065 = vpack.c.b16 %v823, %v822
      %v1066 = vpack.c.b16 %v825, %v824
      %v1067 = vpack.c.b16 %v827, %v826
      %v1068 = vpack.c.b16 %v829, %v828
      %v1069 = vpack.c.b16 %v831, %v830
      %v1070 = vpack.c.b16 %v833, %v832
      %v1071 = vpack.c.b16 %v835, %v834
      %v1072 = vpack.c.b16 %v837, %v836
      %v1073 = vpack.c.b16 %v839, %v838
      %v1074 = vpack.c.b16 %v841, %v840
      %v1075 = vpack.c.b16 %v843, %v842
      %v1076 = vpack.c.b16 %v845, %v844
      %v1077 = vpack.c.b16 %v847, %v846
      %v1078 = vpack.c.b16 %v849, %v848
      %v1079 = vpack.c.b16 %v851, %v850
      %v1080 = vpack.c.b16 %v853, %v852
      %v1081 = vpack.c.b16 %v855, %v854
      %v1082 = vpack.c.b16 %v857, %v856
      %v1083 = vpack.c.b16 %v859, %v858
      %v1084 = vpack.c.b16 %v861, %v860
      %v1085 = vpack.c.b16 %v863, %v862
      %v1086 = vpack.c.b16 %v865, %v864
      %v1087 = vpack.c.b16 %v867, %v866
      %v1088 = vpack.c.b16 %v869, %v868
      %v1089 = vpack.c.b16 %v871, %v870
      %v1090 = vpack.c.b16 %v873, %v872
      %v1091 = vpack.c.b16 %v875, %v874
      %v1092 = vpack.c.b16 %v877, %v876
      %v1093 = vpack.c.b16 %v879, %v878
      %v1094 = vpack.c.b16 %v881, %v880
      %v1095 = vpack.c.b16 %v883, %v882
      %v1096 = vpack.c.b16 %v885, %v884
      %v1097 = vpack.c.b16 %v887, %v886
      %v1098 = vpack.c.b16 %v889, %v888
      %v1099 = vpack.c.b16 %v891, %v890
      %v1100 = vpack.c.b16 %v893, %v892
      %v1101 = vpack.c.b16 %v895, %v894
      %v1102 = vpack.c.b16 %v897, %v896
      %v1103 = vpack.c.b16 %v899, %v898
      %v1104 = vpack.c.b16 %v901, %v900
      %v1105 = vpack.c.b16 %v903, %v902
      %v1106 = vpack.c.b16 %v905, %v904
      %v1107 = vpack.c.b16 %v907, %v906
      %v1108 = vpack.c.b16 %v909, %v908
      %v1109 = vpack.c.b16 %v911, %v910
      %v1110 = vpack.c.b16 %v913, %v912
      %v1111 = vpack.c.b16 %v915, %v914
      %v1112 = vpack.c.b16 %v917, %v916
      %v1113 = vpack.c.b16 %v919, %v918
      %v1114 = vpack.c.b16 %v921, %v920
      %v1115 = vpack.c.b16 %v923, %v922
      %v1116 = vpack.c.b16 %v925, %v924
      %v1117 = vpack.c.b16 %v927, %v926
      %v1118 = vpack.c.b16 %v929, %v928
      %v1119 = vpack.c.b16 %v931, %v930
      %v1120 = vpack.c.b16 %v933, %v932
      %v1121 = vpack.c.b16 %v935, %v934
      %v1122 = vpack.c.b16 %v937, %v936
      %v1123 = vpack.c.b16 %v939, %v938
      %v1124 = vpack.c.b16 %v941, %v940
      %v1125 = vpack.c.b16 %v943, %v942
      %v1126 = vpack.c.b16 %v945, %v944
      %v1127 = vpack.c.b16 %v947, %v946
      %v1128 = vpack.c.b16 %v949, %v948
      %v1129 = vpack.c.b16 %v951, %v950
      %v1130 = vpack.c.b16 %v953, %v952
      %v1131 = vpack.c.b16 %v955, %v954
      %v1132 = vpack.c.b16 %v957, %v956
      %v1133 = vpack.c.b16 %v959, %v958
      %v1134 = vpack.c.b16 %v961, %v960
      %v1135 = vpack.c.b16 %v963, %v962
      %v1136 = vpack.c.b16 %v965, %v964
      %v1137 = vpack.c.b16 %v967, %v966
      %v1138 = vpack.c.b16 %v969, %v968
      %v1139 = vpack.c.b16 %v971, %v970
      %v1140 = vpack.c.b16 %v973, %v972
      %v1141 = vpack.c.b16 %v975, %v974
      %v1142 = vpack.c.b16 %v977, %v976
      %v1143 = vpack.c.b16 %v979, %v978
      %v1144 = vpack.c.b16 %v981, %v980
      %v1145 = vpack.c.b16 %v983, %v982
      %v1146 = vpack.c.b16 %v985, %v984
      %v1147 = vpack.c.b16 %v987, %v986
      %v1148 = vpack.c.b16 %v989, %v988
      %v1149 = vpack.c.b16 %v991, %v990
      %v1150 = vpack.c.b16 %v993, %v992
      %v1151 = vpack.c.b16 %v995, %v994
      %v1152 = vpack.c.b16 %v997, %v996
      %v1153 = vpack.c.b16 %v999, %v998
      %v1154 = vpack.c.b16 %v1001, %v1000
      %v1155 = vpack.c.b16 %v1003, %v1002
      %v1156 = vpack.c.b16 %v1005, %v1004
      %v1157 = vpack.c.b16 %v1007, %v1006
      %v1158 = vpack.c.b16 %v1009, %v1008
      %v1159 = vpack.c.b16 %v1011, %v1010
      %v1160 = vpack.c.b16 %v1013, %v1012
      %v1161 = vpack.c.b16 %v1015, %v1014
      %v1162 = vpack.c.b16 %v1017, %v1016
      %v1163 = vpack.c.b16 %v1019, %v1018
      %v1164 = vpack.c.b16 %v1021, %v1020
      %v1165 = vpack.c.b16 %v1023, %v1022
      %v1166 = vpack.c.b16 %v1025, %v1024
      %v1167 = vpack.c.b16 %v1027, %v1026
      %v1168 = vpack.c.b16 %v1029, %v1028
      %v1169 = vpack.c.b16 %v1031, %v1030
      %v1170 = vpack.c.b16 %v1033, %v1032
      %v1171 = vpack.c.b16 %v1035, %v1034
      %v1172 = vpack.c.b16 %v1037, %v1036
      %v1173 = vpack.c.b16 %v1039, %v1038
      %v1174 = vpack.c.b16 %v1041, %v1040
      %v1175 = vpack.c.b16 %v1043, %v1042
      %v1176 = vpack.c.b16 %v1045, %v1044
      %v1177 = vpack.c.b16 %v1047, %v1046
      %v1178 = vpack.c.b16 %v1049, %v1048
      %v1179 = vpack.c.b16 %v1051, %v1050
      %1308 = vmatpush.bf16.msra.mxu0 %v1059
      %1309 = vmatpush.bf16.msra.mxu0 %v1058
      %1310 = vmatpush.bf16.msra.mxu0 %v1057
      %1311 = vmatpush.bf16.msra.mxu0 %v1056
      %1312 = vmatpush.bf16.msra.mxu0 %v1055
      %1313 = vmatpush.bf16.msra.mxu0 %v1054
      %1314 = vmatpush.bf16.msra.mxu0 %v1053
      %1315 = vmatpush.bf16.msra.mxu0 %v1052
      %1316 = vmatmul.bf16.gmra.mxu0 %v508
      %v1317 = vpop.f32.mrf.mxu0
      %v1318 = vadd.f32 0.0, %v1317
      %v1319 = vpop.f32.mrf.mxu0
      %v1320 = vadd.f32 0.0, %v1319
      %1321 = vdwg.mxu0
      %1322 = vmatpush.bf16.msra.mxu0 %v1067
      %1323 = vmatpush.bf16.msra.mxu0 %v1066
      %1324 = vmatpush.bf16.msra.mxu0 %v1065
      %1325 = vmatpush.bf16.msra.mxu0 %v1064
      %1326 = vmatpush.bf16.msra.mxu0 %v1063
      %1327 = vmatpush.bf16.msra.mxu0 %v1062
      %1328 = vmatpush.bf16.msra.mxu0 %v1061
      %1329 = vmatpush.bf16.msra.mxu0 %v1060
      %1330 = vmatmul.bf16.gmra.mxu0 %v509
      %v1331 = vpop.f32.mrf.mxu0
      %v1332 = vadd.f32 %v1318, %v1331
      %v1333 = vpop.f32.mrf.mxu0
      %v1334 = vadd.f32 %v1320, %v1333
      %1335 = vdwg.mxu0
      %1336 = vmatpush.bf16.msra.mxu0 %v1075
      %1337 = vmatpush.bf16.msra.mxu0 %v1074
      %1338 = vmatpush.bf16.msra.mxu0 %v1073
      %1339 = vmatpush.bf16.msra.mxu0 %v1072
      %1340 = vmatpush.bf16.msra.mxu0 %v1071
      %1341 = vmatpush.bf16.msra.mxu0 %v1070
      %1342 = vmatpush.bf16.msra.mxu0 %v1069
      %1343 = vmatpush.bf16.msra.mxu0 %v1068
      %1344 = vmatmul.bf16.gmra.mxu0 %v510
      %v1345 = vpop.f32.mrf.mxu0
      %v1346 = vadd.f32 %v1332, %v1345
      %v1347 = vpop.f32.mrf.mxu0
      %v1348 = vadd.f32 %v1334, %v1347
      %1349 = vdwg.mxu0
      %1350 = vmatpush.bf16.msra.mxu0 %v1083
      %1351 = vmatpush.bf16.msra.mxu0 %v1082
      %1352 = vmatpush.bf16.msra.mxu0 %v1081
      %1353 = vmatpush.bf16.msra.mxu0 %v1080
      %1354 = vmatpush.bf16.msra.mxu0 %v1079
      %1355 = vmatpush.bf16.msra.mxu0 %v1078
      %1356 = vmatpush.bf16.msra.mxu0 %v1077
      %1357 = vmatpush.bf16.msra.mxu0 %v1076
      %1358 = vmatmul.bf16.gmra.mxu0 %v511
      %v1359 = vpop.f32.mrf.mxu0
      %v1360 = vadd.f32 %v1346, %v1359
      %v1361 = vpop.f32.mrf.mxu0
      %v1362 = vadd.f32 %v1348, %v1361
      %1363 = vdwg.mxu0
      %1364 = vmatpush.bf16.msra.mxu0 %v1091
      %1365 = vmatpush.bf16.msra.mxu0 %v1090
      %1366 = vmatpush.bf16.msra.mxu0 %v1089
      %1367 = vmatpush.bf16.msra.mxu0 %v1088
      %1368 = vmatpush.bf16.msra.mxu0 %v1087
      %1369 = vmatpush.bf16.msra.mxu0 %v1086
      %1370 = vmatpush.bf16.msra.mxu0 %v1085
      %1371 = vmatpush.bf16.msra.mxu0 %v1084
      %1372 = vmatmul.bf16.gmra.mxu0 %v512
      %v1373 = vpop.f32.mrf.mxu0
      %v1374 = vadd.f32 %v1360, %v1373
      %v1375 = vpop.f32.mrf.mxu0
      %v1376 = vadd.f32 %v1362, %v1375
      %1377 = vdwg.mxu0
      %1378 = vmatpush.bf16.msra.mxu0 %v1099
      %1379 = vmatpush.bf16.msra.mxu0 %v1098
      %1380 = vmatpush.bf16.msra.mxu0 %v1097
      %1381 = vmatpush.bf16.msra.mxu0 %v1096
      %1382 = vmatpush.bf16.msra.mxu0 %v1095
      %1383 = vmatpush.bf16.msra.mxu0 %v1094
      %1384 = vmatpush.bf16.msra.mxu0 %v1093
      %1385 = vmatpush.bf16.msra.mxu0 %v1092
      %1386 = vmatmul.bf16.gmra.mxu0 %v513
      %v1387 = vpop.f32.mrf.mxu0
      %v1388 = vadd.f32 %v1374, %v1387
      %v1389 = vpop.f32.mrf.mxu0
      %v1390 = vadd.f32 %v1376, %v1389
      %1391 = vdwg.mxu0
      %1392 = vmatpush.bf16.msra.mxu0 %v1107
      %1393 = vmatpush.bf16.msra.mxu0 %v1106
      %1394 = vmatpush.bf16.msra.mxu0 %v1105
      %1395 = vmatpush.bf16.msra.mxu0 %v1104
      %1396 = vmatpush.bf16.msra.mxu0 %v1103
      %1397 = vmatpush.bf16.msra.mxu0 %v1102
      %1398 = vmatpush.bf16.msra.mxu0 %v1101
      %1399 = vmatpush.bf16.msra.mxu0 %v1100
      %1400 = vmatmul.bf16.gmra.mxu0 %v514
      %v1401 = vpop.f32.mrf.mxu0
      %v1402 = vadd.f32 %v1388, %v1401
      %v1403 = vpop.f32.mrf.mxu0
      %v1404 = vadd.f32 %v1390, %v1403
      %1405 = vdwg.mxu0
      %1406 = vmatpush.bf16.msra.mxu0 %v1115
      %1407 = vmatpush.bf16.msra.mxu0 %v1114
      %1408 = vmatpush.bf16.msra.mxu0 %v1113
      %1409 = vmatpush.bf16.msra.mxu0 %v1112
      %1410 = vmatpush.bf16.msra.mxu0 %v1111
      %1411 = vmatpush.bf16.msra.mxu0 %v1110
      %1412 = vmatpush.bf16.msra.mxu0 %v1109
      %1413 = vmatpush.bf16.msra.mxu0 %v1108
      %1414 = vmatmul.bf16.gmra.mxu0 %v515
      %v1415 = vpop.f32.mrf.mxu0
      %v1416 = vadd.f32 %v1402, %v1415
      %v1417 = vpop.f32.mrf.mxu0
      %v1418 = vadd.f32 %v1404, %v1417
      %1419 = vdwg.mxu0
      %1420 = vmatpush.bf16.msra.mxu0 %v1123
      %1421 = vmatpush.bf16.msra.mxu0 %v1122
      %1422 = vmatpush.bf16.msra.mxu0 %v1121
      %1423 = vmatpush.bf16.msra.mxu0 %v1120
      %1424 = vmatpush.bf16.msra.mxu0 %v1119
      %1425 = vmatpush.bf16.msra.mxu0 %v1118
      %1426 = vmatpush.bf16.msra.mxu0 %v1117
      %1427 = vmatpush.bf16.msra.mxu0 %v1116
      %1428 = vmatmul.bf16.gmra.mxu0 %v516
      %v1429 = vpop.f32.mrf.mxu0
      %v1430 = vadd.f32 %v1416, %v1429
      %v1431 = vpop.f32.mrf.mxu0
      %v1432 = vadd.f32 %v1418, %v1431
      %1433 = vdwg.mxu0
      %1434 = vmatpush.bf16.msra.mxu0 %v1131
      %1435 = vmatpush.bf16.msra.mxu0 %v1130
      %1436 = vmatpush.bf16.msra.mxu0 %v1129
      %1437 = vmatpush.bf16.msra.mxu0 %v1128
      %1438 = vmatpush.bf16.msra.mxu0 %v1127
      %1439 = vmatpush.bf16.msra.mxu0 %v1126
      %1440 = vmatpush.bf16.msra.mxu0 %v1125
      %1441 = vmatpush.bf16.msra.mxu0 %v1124
      %1442 = vmatmul.bf16.gmra.mxu0 %v517
      %v1443 = vpop.f32.mrf.mxu0
      %v1444 = vadd.f32 %v1430, %v1443
      %v1445 = vpop.f32.mrf.mxu0
      %v1446 = vadd.f32 %v1432, %v1445
      %1447 = vdwg.mxu0
      %1448 = vmatpush.bf16.msra.mxu0 %v1139
      %1449 = vmatpush.bf16.msra.mxu0 %v1138
      %1450 = vmatpush.bf16.msra.mxu0 %v1137
      %1451 = vmatpush.bf16.msra.mxu0 %v1136
      %1452 = vmatpush.bf16.msra.mxu0 %v1135
      %1453 = vmatpush.bf16.msra.mxu0 %v1134
      %1454 = vmatpush.bf16.msra.mxu0 %v1133
      %1455 = vmatpush.bf16.msra.mxu0 %v1132
      %1456 = vmatmul.bf16.gmra.mxu0 %v518
      %v1457 = vpop.f32.mrf.mxu0
      %v1458 = vadd.f32 %v1444, %v1457
      %v1459 = vpop.f32.mrf.mxu0
      %v1460 = vadd.f32 %v1446, %v1459
      %1461 = vdwg.mxu0
      %1462 = vmatpush.bf16.msra.mxu0 %v1147
      %1463 = vmatpush.bf16.msra.mxu0 %v1146
      %1464 = vmatpush.bf16.msra.mxu0 %v1145
      %1465 = vmatpush.bf16.msra.mxu0 %v1144
      %1466 = vmatpush.bf16.msra.mxu0 %v1143
      %1467 = vmatpush.bf16.msra.mxu0 %v1142
      %1468 = vmatpush.bf16.msra.mxu0 %v1141
      %1469 = vmatpush.bf16.msra.mxu0 %v1140
      %1470 = vmatmul.bf16.gmra.mxu0 %v519
      %v1471 = vpop.f32.mrf.mxu0
      %v1472 = vadd.f32 %v1458, %v1471
      %v1473 = vpop.f32.mrf.mxu0
      %v1474 = vadd.f32 %v1460, %v1473
      %1475 = vdwg.mxu0
      %1476 = vmatpush.bf16.msra.mxu0 %v1155
      %1477 = vmatpush.bf16.msra.mxu0 %v1154
      %1478 = vmatpush.bf16.msra.mxu0 %v1153
      %1479 = vmatpush.bf16.msra.mxu0 %v1152
      %1480 = vmatpush.bf16.msra.mxu0 %v1151
      %1481 = vmatpush.bf16.msra.mxu0 %v1150
      %1482 = vmatpush.bf16.msra.mxu0 %v1149
      %1483 = vmatpush.bf16.msra.mxu0 %v1148
      %1484 = vmatmul.bf16.gmra.mxu0 %v520
      %v1485 = vpop.f32.mrf.mxu0
      %v1486 = vadd.f32 %v1472, %v1485
      %v1487 = vpop.f32.mrf.mxu0
      %v1488 = vadd.f32 %v1474, %v1487
      %1489 = vdwg.mxu0
      %1490 = vmatpush.bf16.msra.mxu0 %v1163
      %1491 = vmatpush.bf16.msra.mxu0 %v1162
      %1492 = vmatpush.bf16.msra.mxu0 %v1161
      %1493 = vmatpush.bf16.msra.mxu0 %v1160
      %1494 = vmatpush.bf16.msra.mxu0 %v1159
      %1495 = vmatpush.bf16.msra.mxu0 %v1158
      %1496 = vmatpush.bf16.msra.mxu0 %v1157
      %1497 = vmatpush.bf16.msra.mxu0 %v1156
      %1498 = vmatmul.bf16.gmra.mxu0 %v521
      %v1499 = vpop.f32.mrf.mxu0
      %v1500 = vadd.f32 %v1486, %v1499
      %v1501 = vpop.f32.mrf.mxu0
      %v1502 = vadd.f32 %v1488, %v1501
      %1503 = vdwg.mxu0
      %1504 = vmatpush.bf16.msra.mxu0 %v1171
      %1505 = vmatpush.bf16.msra.mxu0 %v1170
      %1506 = vmatpush.bf16.msra.mxu0 %v1169
      %1507 = vmatpush.bf16.msra.mxu0 %v1168
      %1508 = vmatpush.bf16.msra.mxu0 %v1167
      %1509 = vmatpush.bf16.msra.mxu0 %v1166
      %1510 = vmatpush.bf16.msra.mxu0 %v1165
      %1511 = vmatpush.bf16.msra.mxu0 %v1164
      %1512 = vmatmul.bf16.gmra.mxu0 %v522
      %v1513 = vpop.f32.mrf.mxu0
      %v1514 = vadd.f32 %v1500, %v1513
      %v1515 = vpop.f32.mrf.mxu0
      %v1516 = vadd.f32 %v1502, %v1515
      %1517 = vdwg.mxu0
      %1518 = vmatpush.bf16.msra.mxu0 %v1179
      %1519 = vmatpush.bf16.msra.mxu0 %v1178
      %1520 = vmatpush.bf16.msra.mxu0 %v1177
      %1521 = vmatpush.bf16.msra.mxu0 %v1176
      %1522 = vmatpush.bf16.msra.mxu0 %v1175
      %1523 = vmatpush.bf16.msra.mxu0 %v1174
      %1524 = vmatpush.bf16.msra.mxu0 %v1173
      %1525 = vmatpush.bf16.msra.mxu0 %v1172
      %1526 = vmatmul.bf16.gmra.mxu0 %v523
      %v1527 = vpop.f32.mrf.mxu0
      %v1528 = vadd.f32 %v1514, %v1527
      %v1529 = vpop.f32.mrf.mxu0
      %v1530 = vadd.f32 %v1516, %v1529
      %1531 = vdwg.mxu0
      %1532 = vst [vmem:[%s182] sm:$0xff] %v1528
      %1533 = vst [vmem:[%s182 + $0x8] sm:$0xff] %v1530
      %v1534 = vadd.f32 %v1528, %v1530
      %v1535 = vrot.slane %v1534, 4
      %v1536 = vadd.f32 %v1534, %v1535
      %v1537 = vrot.slane %v1536, 2
      %v1538 = vadd.f32 %v1536, %v1537
      %v1539 = vrot.slane %v1538, 1
      %v1540 = vadd.f32 %v1538, %v1539
      %v1541 = vmul.f32 %v1528, %v1528
      %v1542 = vmul.f32 %v1530, %v1530
      %v1543 = vadd.f32 %v1541, %v1542
      %v1544 = vrot.slane %v1543, 4
      %v1545 = vadd.f32 %v1543, %v1544
      %v1546 = vrot.slane %v1545, 2
      %v1547 = vadd.f32 %v1545, %v1546
      %v1548 = vrot.slane %v1547, 1
      %v1549 = vadd.f32 %v1547, %v1548
      %v1550 = vlaneseq
      %v1551 = vshrl.u32 %v1550, 7
      %vm1552 = vcmp.eq.s32.totalorder %v1551, 0
      %v1553 = vsel %vm1552, %v1540, 0.0
      %vm1554 = vcmp.eq.s32.totalorder %v1551, 1
      %v1555 = vsel %vm1554, %v1549, 0.0
      %v1556 = vadd.f32 %v1553, %v1555
      %1557 = vst [vmem:[%s187] sm:$0xff] %v1556
      %s1558 = smul.u32 2, %s15
      %p1559 = scmp.lt.s32.totalorder %s1558, 3
      %s1560 = scalar_select %p1559, %s1558, 3
      %s1561 = smul.addr %s1560, 8
      %s1562 = scalar_lea.vmem %s2, %s1561
      %p1563 = scmp.lt.s32.totalorder %s15, 1
      %s1564 = scalar_select %p1563, %s15, 1
      %s1565 = smul.addr %s1564, 8
      %s1566 = scalar_lea.vmem %s3, %s1565
      // Predicated region
      $region29: #{discriminator_forward.4} parent=27 // pred_check
        %p1567 = pneg %p80
      $region30: #{discriminator_forward.4} parent=27 // pred_check_branch
        %1569 = sbr.rel (%p1567) target = $region32
      $region31: #{discriminator_forward.4} parent=27 // pred_region
        %s1570 = smul.u32 2, %s15
      $region32: #{discriminator_forward.4} parent=27 // pred_fallthru
        _
      // Predicated region
      $region33: #{discriminator_forward.4} parent=27 // pred_check
        %p1571 = pneg %p106
      $region34: #{discriminator_forward.4} parent=27 // pred_check_branch
        %1573 = sbr.rel (%p1571) target = $region36
      $region35: #{discriminator_forward.4} parent=27 // pred_region
        _
      $region36: #{discriminator_forward.4} parent=27 // pred_fallthru
        _
    $region28: #{discriminator_forward.4} parent=5 // pred_fallthru
      _
    %p1574 = scmp.le.s32.totalorder 2, %s10
    // Predicated region
    $region37: #{discriminator_forward.4} parent=5 // pred_check
      %p1575 = pneg %p1574
    $region38: #{discriminator_forward.4} parent=5 // pred_check_branch
      %1577 = sbr.rel (%p1575) target = $region40
    $region39: #{discriminator_forward.4} parent=5 // pred_region
      %s1578 = ssub.s32 %s10, 2
      // Predicated region
      $region41: #{discriminator_forward.4} parent=39 // pred_check
        %p1579 = pneg %p86
      $region42: #{discriminator_forward.4} parent=39 // pred_check_branch
        %1581 = sbr.rel (%p1579) target = $region44
      $region43: #{discriminator_forward.4} parent=39 // pred_region
        %s1582 = smul.u32 2, %s16
        %p1583 = scmp.lt.s32.totalorder %s1582, 3
        %s1584 = scalar_select %p1583, %s1582, 3
        %s1585 = smul.addr %s1584, 8
        %s1586 = scalar_lea.vmem %s2, %s1585
      $region44: #{discriminator_forward.4} parent=39 // pred_fallthru
        _
      // Predicated region
      $region45: #{discriminator_forward.4} parent=39 // pred_check
        %p1587 = pneg %p112
      $region46: #{discriminator_forward.4} parent=39 // pred_check_branch
        %1589 = sbr.rel (%p1587) target = $region48
      $region47: #{discriminator_forward.4} parent=39 // pred_region
        %p1590 = scmp.lt.s32.totalorder %s16, 1
        %s1591 = scalar_select %p1590, %s16, 1
        %s1592 = smul.addr %s1591, 8
        %s1593 = scalar_lea.vmem %s3, %s1592
      $region48: #{discriminator_forward.4} parent=39 // pred_fallthru
        _
    $region40: #{discriminator_forward.4} parent=5 // pred_fallthru
      _
  $region6: #{discriminator_forward.4} parent=0 // loop_footer
    %s14 = sadd.s32 1, %s10
  $region7: #{discriminator_forward.4} parent=0 // loop_footer_branch
    %9 = sbr.rel target = $region3
  $region8: #{discriminator_forward.4} parent=0 // loop_exit
    _

// kernel: discriminator_forward.5
$region0: #{discriminator_forward.5}
  #allocation0 [shape = 'u32[]', space=smem, size = 0x4, offset = 0x4, fixed_abs, tag = 'smem constant byte address 0x4 - core index']
  #allocation1 [shape = 'u32[72,128]{1,0:T(1,128)}', space=vmem, size = 0x9000, scoped, tag = 'internal scratch']
  %s0 = inlined_call_operand.vmem [shape: bf16[8,2048], index: 0, kind: input, shape index: {}]
  %s1 = inlined_call_operand.vmem [shape: bf16[2048,128], index: 1, kind: input, shape index: {}]
  %s2 = inlined_call_operand.vmem [shape: f32[8,128], index: 2, kind: output, shape index: {}]
  %s3 = sld [smem:[#allocation0]]
  $region18: #{discriminator_forward.5} parent=0
    _
  %s5 = ssub.s32 1, %s3
  %s6 = scalar_select 0, %s5, %s3
  // Predicated region
  $region2: #{discriminator_forward.5} parent=0 // pred_check
    _
  $region3: #{discriminator_forward.5} parent=0 // pred_check_branch
    %8 = sbr.rel (0) target = $region5
  $region4: #{discriminator_forward.5} parent=0 // pred_region
    _
  $region5: #{discriminator_forward.5} parent=0 // pred_fallthru
    _
  // Predicated region
  $region6: #{discriminator_forward.5} parent=0 // pred_check
    _
  $region7: #{discriminator_forward.5} parent=0 // pred_check_branch
    %10 = sbr.rel (0) target = $region9
  $region8: #{discriminator_forward.5} parent=0 // pred_region
    _
  $region9: #{discriminator_forward.5} parent=0 // pred_fallthru
    _
  %v11 = vld [vmem:[%s0] sm:$0xff]
  %v12 = vld [vmem:[%s0 + $0x8] sm:$0xff]
  %v13 = vld [vmem:[%s0 + $0x10] sm:$0xff]
  %v14 = vld [vmem:[%s0 + $0x18] sm:$0xff]
  %v15 = vld [vmem:[%s0 + $0x20] sm:$0xff]
  %v16 = vld [vmem:[%s0 + $0x28] sm:$0xff]
  %v17 = vld [vmem:[%s0 + $0x30] sm:$0xff]
  %v18 = vld [vmem:[%s0 + $0x38] sm:$0xff]
  %v19 = vld [vmem:[%s1] sm:$0xf]
  %v20 = vld [vmem:[%s1 + $0x4] sm:$0xf]
  %v21 = vld [vmem:[%s1 + $0x8] sm:$0xf]
  %v22 = vld [vmem:[%s1 + $0xc] sm:$0xf]
  %v23 = vld [vmem:[%s1 + $0x10] sm:$0xf]
  %v24 = vld [vmem:[%s1 + $0x14] sm:$0xf]
  %v25 = vld [vmem:[%s1 + $0x18] sm:$0xf]
  %v26 = vld [vmem:[%s1 + $0x1c] sm:$0xf]
  %v27 = vld [vmem:[%s1 + $0x20] sm:$0xf]
  %v28 = vld [vmem:[%s1 + $0x24] sm:$0xf]
  %v29 = vld [vmem:[%s1 + $0x28] sm:$0xf]
  %v30 = vld [vmem:[%s1 + $0x2c] sm:$0xf]
  %v31 = vld [vmem:[%s1 + $0x30] sm:$0xf]
  %v32 = vld [vmem:[%s1 + $0x34] sm:$0xf]
  %v33 = vld [vmem:[%s1 + $0x38] sm:$0xf]
  %v34 = vld [vmem:[%s1 + $0x3c] sm:$0xf]
  %v35 = vld [vmem:[%s1 + $0x40] sm:$0xf]
  %v36 = vld [vmem:[%s1 + $0x44] sm:$0xf]
  %v37 = vld [vmem:[%s1 + $0x48] sm:$0xf]
  %v38 = vld [vmem:[%s1 + $0x4c] sm:$0xf]
  %v39 = vld [vmem:[%s1 + $0x50] sm:$0xf]
  %v40 = vld [vmem:[%s1 + $0x54] sm:$0xf]
  %v41 = vld [vmem:[%s1 + $0x58] sm:$0xf]
  %v42 = vld [vmem:[%s1 + $0x5c] sm:$0xf]
  %v43 = vld [vmem:[%s1 + $0x60] sm:$0xf]
  %v44 = vld [vmem:[%s1 + $0x64] sm:$0xf]
  %v45 = vld [vmem:[%s1 + $0x68] sm:$0xf]
  %v46 = vld [vmem:[%s1 + $0x6c] sm:$0xf]
  %v47 = vld [vmem:[%s1 + $0x70] sm:$0xf]
  %v48 = vld [vmem:[%s1 + $0x74] sm:$0xf]
  %v49 = vld [vmem:[%s1 + $0x78] sm:$0xf]
  %v50 = vld [vmem:[%s1 + $0x7c] sm:$0xf]
  %v51 = vld [vmem:[%s1 + $0x80] sm:$0xf]
  %v52 = vld [vmem:[%s1 + $0x84] sm:$0xf]
  %v53 = vld [vmem:[%s1 + $0x88] sm:$0xf]
  %v54 = vld [vmem:[%s1 + $0x8c] sm:$0xf]
  %v55 = vld [vmem:[%s1 + $0x90] sm:$0xf]
  %v56 = vld [vmem:[%s1 + $0x94] sm:$0xf]
  %v57 = vld [vmem:[%s1 + $0x98] sm:$0xf]
  %v58 = vld [vmem:[%s1 + $0x9c] sm:$0xf]
  %v59 = vld [vmem:[%s1 + $0xa0] sm:$0xf]
  %v60 = vld [vmem:[%s1 + $0xa4] sm:$0xf]
  %v61 = vld [vmem:[%s1 + $0xa8] sm:$0xf]
  %v62 = vld [vmem:[%s1 + $0xac] sm:$0xf]
  %v63 = vld [vmem:[%s1 + $0xb0] sm:$0xf]
  %v64 = vld [vmem:[%s1 + $0xb4] sm:$0xf]
  %v65 = vld [vmem:[%s1 + $0xb8] sm:$0xf]
  %v66 = vld [vmem:[%s1 + $0xbc] sm:$0xf]
  %v67 = vld [vmem:[%s1 + $0xc0] sm:$0xf]
  %v68 = vld [vmem:[%s1 + $0xc4] sm:$0xf]
  %v69 = vld [vmem:[%s1 + $0xc8] sm:$0xf]
  %v70 = vld [vmem:[%s1 + $0xcc] sm:$0xf]
  %v71 = vld [vmem:[%s1 + $0xd0] sm:$0xf]
  %v72 = vld [vmem:[%s1 + $0xd4] sm:$0xf]
  %v73 = vld [vmem:[%s1 + $0xd8] sm:$0xf]
  %v74 = vld [vmem:[%s1 + $0xdc] sm:$0xf]
  %v75 = vld [vmem:[%s1 + $0xe0] sm:$0xf]
  %v76 = vld [vmem:[%s1 + $0xe4] sm:$0xf]
  %v77 = vld [vmem:[%s1 + $0xe8] sm:$0xf]
  %v78 = vld [vmem:[%s1 + $0xec] sm:$0xf]
  %v79 = vld [vmem:[%s1 + $0xf0] sm:$0xf]
  %v80 = vld [vmem:[%s1 + $0xf4] sm:$0xf]
  %v81 = vld [vmem:[%s1 + $0xf8] sm:$0xf]
  %v82 = vld [vmem:[%s1 + $0xfc] sm:$0xf]
  %v83 = vld [vmem:[%s1 + $0x100] sm:$0xf]
  %v84 = vld [vmem:[%s1 + $0x104] sm:$0xf]
  %v85 = vld [vmem:[%s1 + $0x108] sm:$0xf]
  %v86 = vld [vmem:[%s1 + $0x10c] sm:$0xf]
  %v87 = vld [vmem:[%s1 + $0x110] sm:$0xf]
  %v88 = vld [vmem:[%s1 + $0x114] sm:$0xf]
  %v89 = vld [vmem:[%s1 + $0x118] sm:$0xf]
  %v90 = vld [vmem:[%s1 + $0x11c] sm:$0xf]
  %v91 = vld [vmem:[%s1 + $0x120] sm:$0xf]
  %v92 = vld [vmem:[%s1 + $0x124] sm:$0xf]
  %v93 = vld [vmem:[%s1 + $0x128] sm:$0xf]
  %v94 = vld [vmem:[%s1 + $0x12c] sm:$0xf]
  %v95 = vld [vmem:[%s1 + $0x130] sm:$0xf]
  %v96 = vld [vmem:[%s1 + $0x134] sm:$0xf]
  %v97 = vld [vmem:[%s1 + $0x138] sm:$0xf]
  %v98 = vld [vmem:[%s1 + $0x13c] sm:$0xf]
  %v99 = vld [vmem:[%s1 + $0x140] sm:$0xf]
  %v100 = vld [vmem:[%s1 + $0x144] sm:$0xf]
  %v101 = vld [vmem:[%s1 + $0x148] sm:$0xf]
  %v102 = vld [vmem:[%s1 + $0x14c] sm:$0xf]
  %v103 = vld [vmem:[%s1 + $0x150] sm:$0xf]
  %v104 = vld [vmem:[%s1 + $0x154] sm:$0xf]
  %v105 = vld [vmem:[%s1 + $0x158] sm:$0xf]
  %v106 = vld [vmem:[%s1 + $0x15c] sm:$0xf]
  %v107 = vld [vmem:[%s1 + $0x160] sm:$0xf]
  %v108 = vld [vmem:[%s1 + $0x164] sm:$0xf]
  %v109 = vld [vmem:[%s1 + $0x168] sm:$0xf]
  %v110 = vld [vmem:[%s1 + $0x16c] sm:$0xf]
  %v111 = vld [vmem:[%s1 + $0x170] sm:$0xf]
  %v112 = vld [vmem:[%s1 + $0x174] sm:$0xf]
  %v113 = vld [vmem:[%s1 + $0x178] sm:$0xf]
  %v114 = vld [vmem:[%s1 + $0x17c] sm:$0xf]
  %v115 = vld [vmem:[%s1 + $0x180] sm:$0xf]
  %v116 = vld [vmem:[%s1 + $0x184] sm:$0xf]
  %v117 = vld [vmem:[%s1 + $0x188] sm:$0xf]
  %v118 = vld [vmem:[%s1 + $0x18c] sm:$0xf]
  %v119 = vld [vmem:[%s1 + $0x190] sm:$0xf]
  %v120 = vld [vmem:[%s1 + $0x194] sm:$0xf]
  %v121 = vld [vmem:[%s1 + $0x198] sm:$0xf]
  %v122 = vld [vmem:[%s1 + $0x19c] sm:$0xf]
  %v123 = vld [vmem:[%s1 + $0x1a0] sm:$0xf]
  %v124 = vld [vmem:[%s1 + $0x1a4] sm:$0xf]
  %v125 = vld [vmem:[%s1 + $0x1a8] sm:$0xf]
  %v126 = vld [vmem:[%s1 + $0x1ac] sm:$0xf]
  %v127 = vld [vmem:[%s1 + $0x1b0] sm:$0xf]
  %v128 = vld [vmem:[%s1 + $0x1b4] sm:$0xf]
  %v129 = vld [vmem:[%s1 + $0x1b8] sm:$0xf]
  %v130 = vld [vmem:[%s1 + $0x1bc] sm:$0xf]
  %v131 = vld [vmem:[%s1 + $0x1c0] sm:$0xf]
  %v132 = vld [vmem:[%s1 + $0x1c4] sm:$0xf]
  %v133 = vld [vmem:[%s1 + $0x1c8] sm:$0xf]
  %v134 = vld [vmem:[%s1 + $0x1cc] sm:$0xf]
  %v135 = vld [vmem:[%s1 + $0x1d0] sm:$0xf]
  %v136 = vld [vmem:[%s1 + $0x1d4] sm:$0xf]
  %v137 = vld [vmem:[%s1 + $0x1d8] sm:$0xf]
  %v138 = vld [vmem:[%s1 + $0x1dc] sm:$0xf]
  %v139 = vld [vmem:[%s1 + $0x1e0] sm:$0xf]
  %v140 = vld [vmem:[%s1 + $0x1e4] sm:$0xf]
  %v141 = vld [vmem:[%s1 + $0x1e8] sm:$0xf]
  %v142 = vld [vmem:[%s1 + $0x1ec] sm:$0xf]
  %v143 = vld [vmem:[%s1 + $0x1f0] sm:$0xf]
  %v144 = vld [vmem:[%s1 + $0x1f4] sm:$0xf]
  %v145 = vld [vmem:[%s1 + $0x1f8] sm:$0xf]
  %v146 = vld [vmem:[%s1 + $0x1fc] sm:$0xf]
  %v147 = vld [vmem:[%s1 + $0x200] sm:$0xf]
  %v148 = vld [vmem:[%s1 + $0x204] sm:$0xf]
  %v149 = vld [vmem:[%s1 + $0x208] sm:$0xf]
  %v150 = vld [vmem:[%s1 + $0x20c] sm:$0xf]
  %v151 = vld [vmem:[%s1 + $0x210] sm:$0xf]
  %v152 = vld [vmem:[%s1 + $0x214] sm:$0xf]
  %v153 = vld [vmem:[%s1 + $0x218] sm:$0xf]
  %v154 = vld [vmem:[%s1 + $0x21c] sm:$0xf]
  %v155 = vld [vmem:[%s1 + $0x220] sm:$0xf]
  %v156 = vld [vmem:[%s1 + $0x224] sm:$0xf]
  %v157 = vld [vmem:[%s1 + $0x228] sm:$0xf]
  %v158 = vld [vmem:[%s1 + $0x22c] sm:$0xf]
  %v159 = vld [vmem:[%s1 + $0x230] sm:$0xf]
  %v160 = vld [vmem:[%s1 + $0x234] sm:$0xf]
  %v161 = vld [vmem:[%s1 + $0x238] sm:$0xf]
  %v162 = vld [vmem:[%s1 + $0x23c] sm:$0xf]
  %v163 = vld [vmem:[%s1 + $0x240] sm:$0xf]
  %v164 = vld [vmem:[%s1 + $0x244] sm:$0xf]
  %v165 = vld [vmem:[%s1 + $0x248] sm:$0xf]
  %v166 = vld [vmem:[%s1 + $0x24c] sm:$0xf]
  %v167 = vld [vmem:[%s1 + $0x250] sm:$0xf]
  %v168 = vld [vmem:[%s1 + $0x254] sm:$0xf]
  %v169 = vld [vmem:[%s1 + $0x258] sm:$0xf]
  %v170 = vld [vmem:[%s1 + $0x25c] sm:$0xf]
  %v171 = vld [vmem:[%s1 + $0x260] sm:$0xf]
  %v172 = vld [vmem:[%s1 + $0x264] sm:$0xf]
  %v173 = vld [vmem:[%s1 + $0x268] sm:$0xf]
  %v174 = vld [vmem:[%s1 + $0x26c] sm:$0xf]
  %v175 = vld [vmem:[%s1 + $0x270] sm:$0xf]
  %v176 = vld [vmem:[%s1 + $0x274] sm:$0xf]
  %v177 = vld [vmem:[%s1 + $0x278] sm:$0xf]
  %v178 = vld [vmem:[%s1 + $0x27c] sm:$0xf]
  %v179 = vld [vmem:[%s1 + $0x280] sm:$0xf]
  %v180 = vld [vmem:[%s1 + $0x284] sm:$0xf]
  %v181 = vld [vmem:[%s1 + $0x288] sm:$0xf]
  %v182 = vld [vmem:[%s1 + $0x28c] sm:$0xf]
  %v183 = vld [vmem:[%s1 + $0x290] sm:$0xf]
  %v184 = vld [vmem:[%s1 + $0x294] sm:$0xf]
  %v185 = vld [vmem:[%s1 + $0x298] sm:$0xf]
  %v186 = vld [vmem:[%s1 + $0x29c] sm:$0xf]
  %v187 = vld [vmem:[%s1 + $0x2a0] sm:$0xf]
  %v188 = vld [vmem:[%s1 + $0x2a4] sm:$0xf]
  %v189 = vld [vmem:[%s1 + $0x2a8] sm:$0xf]
  %v190 = vld [vmem:[%s1 + $0x2ac] sm:$0xf]
  %v191 = vld [vmem:[%s1 + $0x2b0] sm:$0xf]
  %v192 = vld [vmem:[%s1 + $0x2b4] sm:$0xf]
  %v193 = vld [vmem:[%s1 + $0x2b8] sm:$0xf]
  %v194 = vld [vmem:[%s1 + $0x2bc] sm:$0xf]
  %v195 = vld [vmem:[%s1 + $0x2c0] sm:$0xf]
  %v196 = vld [vmem:[%s1 + $0x2c4] sm:$0xf]
  %v197 = vld [vmem:[%s1 + $0x2c8] sm:$0xf]
  %v198 = vld [vmem:[%s1 + $0x2cc] sm:$0xf]
  %v199 = vld [vmem:[%s1 + $0x2d0] sm:$0xf]
  %v200 = vld [vmem:[%s1 + $0x2d4] sm:$0xf]
  %v201 = vld [vmem:[%s1 + $0x2d8] sm:$0xf]
  %v202 = vld [vmem:[%s1 + $0x2dc] sm:$0xf]
  %v203 = vld [vmem:[%s1 + $0x2e0] sm:$0xf]
  %v204 = vld [vmem:[%s1 + $0x2e4] sm:$0xf]
  %v205 = vld [vmem:[%s1 + $0x2e8] sm:$0xf]
  %v206 = vld [vmem:[%s1 + $0x2ec] sm:$0xf]
  %v207 = vld [vmem:[%s1 + $0x2f0] sm:$0xf]
  %v208 = vld [vmem:[%s1 + $0x2f4] sm:$0xf]
  %v209 = vld [vmem:[%s1 + $0x2f8] sm:$0xf]
  %v210 = vld [vmem:[%s1 + $0x2fc] sm:$0xf]
  %v211 = vld [vmem:[%s1 + $0x300] sm:$0xf]
  %v212 = vld [vmem:[%s1 + $0x304] sm:$0xf]
  %v213 = vld [vmem:[%s1 + $0x308] sm:$0xf]
  %v214 = vld [vmem:[%s1 + $0x30c] sm:$0xf]
  %v215 = vld [vmem:[%s1 + $0x310] sm:$0xf]
  %v216 = vld [vmem:[%s1 + $0x314] sm:$0xf]
  %v217 = vld [vmem:[%s1 + $0x318] sm:$0xf]
  %v218 = vld [vmem:[%s1 + $0x31c] sm:$0xf]
  %v219 = vld [vmem:[%s1 + $0x320] sm:$0xf]
  %v220 = vld [vmem:[%s1 + $0x324] sm:$0xf]
  %v221 = vld [vmem:[%s1 + $0x328] sm:$0xf]
  %v222 = vld [vmem:[%s1 + $0x32c] sm:$0xf]
  %v223 = vld [vmem:[%s1 + $0x330] sm:$0xf]
  %v224 = vld [vmem:[%s1 + $0x334] sm:$0xf]
  %v225 = vld [vmem:[%s1 + $0x338] sm:$0xf]
  %v226 = vld [vmem:[%s1 + $0x33c] sm:$0xf]
  %v227 = vld [vmem:[%s1 + $0x340] sm:$0xf]
  %v228 = vld [vmem:[%s1 + $0x344] sm:$0xf]
  %v229 = vld [vmem:[%s1 + $0x348] sm:$0xf]
  %v230 = vld [vmem:[%s1 + $0x34c] sm:$0xf]
  %v231 = vld [vmem:[%s1 + $0x350] sm:$0xf]
  %v232 = vld [vmem:[%s1 + $0x354] sm:$0xf]
  %v233 = vld [vmem:[%s1 + $0x358] sm:$0xf]
  %v234 = vld [vmem:[%s1 + $0x35c] sm:$0xf]
  %v235 = vld [vmem:[%s1 + $0x360] sm:$0xf]
  %v236 = vld [vmem:[%s1 + $0x364] sm:$0xf]
  %v237 = vld [vmem:[%s1 + $0x368] sm:$0xf]
  %v238 = vld [vmem:[%s1 + $0x36c] sm:$0xf]
  %v239 = vld [vmem:[%s1 + $0x370] sm:$0xf]
  %v240 = vld [vmem:[%s1 + $0x374] sm:$0xf]
  %v241 = vld [vmem:[%s1 + $0x378] sm:$0xf]
  %v242 = vld [vmem:[%s1 + $0x37c] sm:$0xf]
  %v243 = vld [vmem:[%s1 + $0x380] sm:$0xf]
  %v244 = vld [vmem:[%s1 + $0x384] sm:$0xf]
  %v245 = vld [vmem:[%s1 + $0x388] sm:$0xf]
  %v246 = vld [vmem:[%s1 + $0x38c] sm:$0xf]
  %v247 = vld [vmem:[%s1 + $0x390] sm:$0xf]
  %v248 = vld [vmem:[%s1 + $0x394] sm:$0xf]
  %v249 = vld [vmem:[%s1 + $0x398] sm:$0xf]
  %v250 = vld [vmem:[%s1 + $0x39c] sm:$0xf]
  %v251 = vld [vmem:[%s1 + $0x3a0] sm:$0xf]
  %v252 = vld [vmem:[%s1 + $0x3a4] sm:$0xf]
  %v253 = vld [vmem:[%s1 + $0x3a8] sm:$0xf]
  %v254 = vld [vmem:[%s1 + $0x3ac] sm:$0xf]
  %v255 = vld [vmem:[%s1 + $0x3b0] sm:$0xf]
  %v256 = vld [vmem:[%s1 + $0x3b4] sm:$0xf]
  %v257 = vld [vmem:[%s1 + $0x3b8] sm:$0xf]
  %v258 = vld [vmem:[%s1 + $0x3bc] sm:$0xf]
  %v259 = vld [vmem:[%s1 + $0x3c0] sm:$0xf]
  %v260 = vld [vmem:[%s1 + $0x3c4] sm:$0xf]
  %v261 = vld [vmem:[%s1 + $0x3c8] sm:$0xf]
  %v262 = vld [vmem:[%s1 + $0x3cc] sm:$0xf]
  %v263 = vld [vmem:[%s1 + $0x3d0] sm:$0xf]
  %v264 = vld [vmem:[%s1 + $0x3d4] sm:$0xf]
  %v265 = vld [vmem:[%s1 + $0x3d8] sm:$0xf]
  %v266 = vld [vmem:[%s1 + $0x3dc] sm:$0xf]
  %v267 = vld [vmem:[%s1 + $0x3e0] sm:$0xf]
  %v268 = vld [vmem:[%s1 + $0x3e4] sm:$0xf]
  %v269 = vld [vmem:[%s1 + $0x3e8] sm:$0xf]
  %v270 = vld [vmem:[%s1 + $0x3ec] sm:$0xf]
  %v271 = vld [vmem:[%s1 + $0x3f0] sm:$0xf]
  %v272 = vld [vmem:[%s1 + $0x3f4] sm:$0xf]
  %v273 = vld [vmem:[%s1 + $0x3f8] sm:$0xf]
  %v274 = vld [vmem:[%s1 + $0x3fc] sm:$0xf]
  %v283 = vunpack.c.l.b16 %v11
  %v284 = vunpack.c.h.b16 %v11
  %v285 = vunpack.c.l.b16 %v12
  %v286 = vunpack.c.h.b16 %v12
  %v287 = vunpack.c.l.b16 %v13
  %v288 = vunpack.c.h.b16 %v13
  %v289 = vunpack.c.l.b16 %v14
  %v290 = vunpack.c.h.b16 %v14
  %v291 = vunpack.c.l.b16 %v15
  %v292 = vunpack.c.h.b16 %v15
  %v293 = vunpack.c.l.b16 %v16
  %v294 = vunpack.c.h.b16 %v16
  %v295 = vunpack.c.l.b16 %v17
  %v296 = vunpack.c.h.b16 %v17
  %v297 = vunpack.c.l.b16 %v18
  %v298 = vunpack.c.h.b16 %v18
  %v299 = vpack.c.b16 %v283, %v283
  %v300 = vpack.c.b16 %v284, %v284
  %v301 = vpack.c.b16 %v285, %v285
  %v302 = vpack.c.b16 %v286, %v286
  %v303 = vpack.c.b16 %v287, %v287
  %v304 = vpack.c.b16 %v288, %v288
  %v305 = vpack.c.b16 %v289, %v289
  %v306 = vpack.c.b16 %v290, %v290
  %v307 = vpack.c.b16 %v291, %v291
  %v308 = vpack.c.b16 %v292, %v292
  %v309 = vpack.c.b16 %v293, %v293
  %v310 = vpack.c.b16 %v294, %v294
  %v311 = vpack.c.b16 %v295, %v295
  %v312 = vpack.c.b16 %v296, %v296
  %v313 = vpack.c.b16 %v297, %v297
  %v314 = vpack.c.b16 %v298, %v298
  %v587 = vunpack.c.l.b16 %v19
  %v588 = vunpack.c.l.b16 %v20
  %v589 = vunpack.c.l.b16 %v21
  %v590 = vunpack.c.l.b16 %v22
  %v591 = vunpack.c.l.b16 %v23
  %v592 = vunpack.c.l.b16 %v24
  %v593 = vunpack.c.l.b16 %v25
  %v594 = vunpack.c.l.b16 %v26
  %v595 = vunpack.c.l.b16 %v27
  %v596 = vunpack.c.l.b16 %v28
  %v597 = vunpack.c.l.b16 %v29
  %v598 = vunpack.c.l.b16 %v30
  %v599 = vunpack.c.l.b16 %v31
  %v600 = vunpack.c.l.b16 %v32
  %v601 = vunpack.c.l.b16 %v33
  %v602 = vunpack.c.l.b16 %v34
  %v603 = vunpack.c.l.b16 %v35
  %v604 = vunpack.c.l.b16 %v36
  %v605 = vunpack.c.l.b16 %v37
  %v606 = vunpack.c.l.b16 %v38
  %v607 = vunpack.c.l.b16 %v39
  %v608 = vunpack.c.l.b16 %v40
  %v609 = vunpack.c.l.b16 %v41
  %v610 = vunpack.c.l.b16 %v42
  %v611 = vunpack.c.l.b16 %v43
  %v612 = vunpack.c.l.b16 %v44
  %v613 = vunpack.c.l.b16 %v45
  %v614 = vunpack.c.l.b16 %v46
  %v615 = vunpack.c.l.b16 %v47
  %v616 = vunpack.c.l.b16 %v48
  %v617 = vunpack.c.l.b16 %v49
  %v618 = vunpack.c.l.b16 %v50
  %v619 = vunpack.c.l.b16 %v51
  %v620 = vunpack.c.l.b16 %v52
  %v621 = vunpack.c.l.b16 %v53
  %v622 = vunpack.c.l.b16 %v54
  %v623 = vunpack.c.l.b16 %v55
  %v624 = vunpack.c.l.b16 %v56
  %v625 = vunpack.c.l.b16 %v57
  %v626 = vunpack.c.l.b16 %v58
  %v627 = vunpack.c.l.b16 %v59
  %v628 = vunpack.c.l.b16 %v60
  %v629 = vunpack.c.l.b16 %v61
  %v630 = vunpack.c.l.b16 %v62
  %v631 = vunpack.c.l.b16 %v63
  %v632 = vunpack.c.l.b16 %v64
  %v633 = vunpack.c.l.b16 %v65
  %v634 = vunpack.c.l.b16 %v66
  %v635 = vunpack.c.l.b16 %v67
  %v636 = vunpack.c.l.b16 %v68
  %v637 = vunpack.c.l.b16 %v69
  %v638 = vunpack.c.l.b16 %v70
  %v639 = vunpack.c.l.b16 %v71
  %v640 = vunpack.c.l.b16 %v72
  %v641 = vunpack.c.l.b16 %v73
  %v642 = vunpack.c.l.b16 %v74
  %v643 = vunpack.c.l.b16 %v75
  %v644 = vunpack.c.l.b16 %v76
  %v645 = vunpack.c.l.b16 %v77
  %v646 = vunpack.c.l.b16 %v78
  %v647 = vunpack.c.l.b16 %v79
  %v648 = vunpack.c.l.b16 %v80
  %v649 = vunpack.c.l.b16 %v81
  %v650 = vunpack.c.l.b16 %v82
  %v651 = vunpack.c.l.b16 %v83
  %v652 = vunpack.c.l.b16 %v84
  %v653 = vunpack.c.l.b16 %v85
  %v654 = vunpack.c.l.b16 %v86
  %v655 = vunpack.c.l.b16 %v87
  %v656 = vunpack.c.l.b16 %v88
  %v657 = vunpack.c.l.b16 %v89
  %v658 = vunpack.c.l.b16 %v90
  %v659 = vunpack.c.l.b16 %v91
  %v660 = vunpack.c.l.b16 %v92
  %v661 = vunpack.c.l.b16 %v93
  %v662 = vunpack.c.l.b16 %v94
  %v663 = vunpack.c.l.b16 %v95
  %v664 = vunpack.c.l.b16 %v96
  %v665 = vunpack.c.l.b16 %v97
  %v666 = vunpack.c.l.b16 %v98
  %v667 = vunpack.c.l.b16 %v99
  %v668 = vunpack.c.l.b16 %v100
  %v669 = vunpack.c.l.b16 %v101
  %v670 = vunpack.c.l.b16 %v102
  %v671 = vunpack.c.l.b16 %v103
  %v672 = vunpack.c.l.b16 %v104
  %v673 = vunpack.c.l.b16 %v105
  %v674 = vunpack.c.l.b16 %v106
  %v675 = vunpack.c.l.b16 %v107
  %v676 = vunpack.c.l.b16 %v108
  %v677 = vunpack.c.l.b16 %v109
  %v678 = vunpack.c.l.b16 %v110
  %v679 = vunpack.c.l.b16 %v111
  %v680 = vunpack.c.l.b16 %v112
  %v681 = vunpack.c.l.b16 %v113
  %v682 = vunpack.c.l.b16 %v114
  %v683 = vunpack.c.l.b16 %v115
  %v684 = vunpack.c.l.b16 %v116
  %v685 = vunpack.c.l.b16 %v117
  %v686 = vunpack.c.l.b16 %v118
  %v687 = vunpack.c.l.b16 %v119
  %v688 = vunpack.c.l.b16 %v120
  %v689 = vunpack.c.l.b16 %v121
  %v690 = vunpack.c.l.b16 %v122
  %v691 = vunpack.c.l.b16 %v123
  %v692 = vunpack.c.l.b16 %v124
  %v693 = vunpack.c.l.b16 %v125
  %v694 = vunpack.c.l.b16 %v126
  %v695 = vunpack.c.l.b16 %v127
  %v696 = vunpack.c.l.b16 %v128
  %v697 = vunpack.c.l.b16 %v129
  %v698 = vunpack.c.l.b16 %v130
  %v699 = vunpack.c.l.b16 %v131
  %v700 = vunpack.c.l.b16 %v132
  %v701 = vunpack.c.l.b16 %v133
  %v702 = vunpack.c.l.b16 %v134
  %v703 = vunpack.c.l.b16 %v135
  %v704 = vunpack.c.l.b16 %v136
  %v705 = vunpack.c.l.b16 %v137
  %v706 = vunpack.c.l.b16 %v138
  %v707 = vunpack.c.l.b16 %v139
  %v708 = vunpack.c.l.b16 %v140
  %v709 = vunpack.c.l.b16 %v141
  %v710 = vunpack.c.l.b16 %v142
  %v711 = vunpack.c.l.b16 %v143
  %v712 = vunpack.c.l.b16 %v144
  %v713 = vunpack.c.l.b16 %v145
  %v714 = vunpack.c.l.b16 %v146
  %v715 = vunpack.c.l.b16 %v147
  %v716 = vunpack.c.l.b16 %v148
  %v717 = vunpack.c.l.b16 %v149
  %v718 = vunpack.c.l.b16 %v150
  %v719 = vunpack.c.l.b16 %v151
  %v720 = vunpack.c.l.b16 %v152
  %v721 = vunpack.c.l.b16 %v153
  %v722 = vunpack.c.l.b16 %v154
  %v723 = vunpack.c.l.b16 %v155
  %v724 = vunpack.c.l.b16 %v156
  %v725 = vunpack.c.l.b16 %v157
  %v726 = vunpack.c.l.b16 %v158
  %v727 = vunpack.c.l.b16 %v159
  %v728 = vunpack.c.l.b16 %v160
  %v729 = vunpack.c.l.b16 %v161
  %v730 = vunpack.c.l.b16 %v162
  %v731 = vunpack.c.l.b16 %v163
  %v732 = vunpack.c.l.b16 %v164
  %v733 = vunpack.c.l.b16 %v165
  %v734 = vunpack.c.l.b16 %v166
  %v735 = vunpack.c.l.b16 %v167
  %v736 = vunpack.c.l.b16 %v168
  %v737 = vunpack.c.l.b16 %v169
  %v738 = vunpack.c.l.b16 %v170
  %v739 = vunpack.c.l.b16 %v171
  %v740 = vunpack.c.l.b16 %v172
  %v741 = vunpack.c.l.b16 %v173
  %v742 = vunpack.c.l.b16 %v174
  %v743 = vunpack.c.l.b16 %v175
  %v744 = vunpack.c.l.b16 %v176
  %v745 = vunpack.c.l.b16 %v177
  %v746 = vunpack.c.l.b16 %v178
  %v747 = vunpack.c.l.b16 %v179
  %v748 = vunpack.c.l.b16 %v180
  %v749 = vunpack.c.l.b16 %v181
  %v750 = vunpack.c.l.b16 %v182
  %v751 = vunpack.c.l.b16 %v183
  %v752 = vunpack.c.l.b16 %v184
  %v753 = vunpack.c.l.b16 %v185
  %v754 = vunpack.c.l.b16 %v186
  %v755 = vunpack.c.l.b16 %v187
  %v756 = vunpack.c.l.b16 %v188
  %v757 = vunpack.c.l.b16 %v189
  %v758 = vunpack.c.l.b16 %v190
  %v759 = vunpack.c.l.b16 %v191
  %v760 = vunpack.c.l.b16 %v192
  %v761 = vunpack.c.l.b16 %v193
  %v762 = vunpack.c.l.b16 %v194
  %v763 = vunpack.c.l.b16 %v195
  %v764 = vunpack.c.l.b16 %v196
  %v765 = vunpack.c.l.b16 %v197
  %v766 = vunpack.c.l.b16 %v198
  %v767 = vunpack.c.l.b16 %v199
  %v768 = vunpack.c.l.b16 %v200
  %v769 = vunpack.c.l.b16 %v201
  %v770 = vunpack.c.l.b16 %v202
  %v771 = vunpack.c.l.b16 %v203
  %v772 = vunpack.c.l.b16 %v204
  %v773 = vunpack.c.l.b16 %v205
  %v774 = vunpack.c.l.b16 %v206
  %v775 = vunpack.c.l.b16 %v207
  %v776 = vunpack.c.l.b16 %v208
  %v777 = vunpack.c.l.b16 %v209
  %v778 = vunpack.c.l.b16 %v210
  %v779 = vunpack.c.l.b16 %v211
  %v780 = vunpack.c.l.b16 %v212
  %v781 = vunpack.c.l.b16 %v213
  %v782 = vunpack.c.l.b16 %v214
  %v783 = vunpack.c.l.b16 %v215
  %v784 = vunpack.c.l.b16 %v216
  %v785 = vunpack.c.l.b16 %v217
  %v786 = vunpack.c.l.b16 %v218
  %v787 = vunpack.c.l.b16 %v219
  %v788 = vunpack.c.l.b16 %v220
  %v789 = vunpack.c.l.b16 %v221
  %v790 = vunpack.c.l.b16 %v222
  %v791 = vunpack.c.l.b16 %v223
  %v792 = vunpack.c.l.b16 %v224
  %v793 = vunpack.c.l.b16 %v225
  %v794 = vunpack.c.l.b16 %v226
  %v795 = vunpack.c.l.b16 %v227
  %v796 = vunpack.c.l.b16 %v228
  %v797 = vunpack.c.l.b16 %v229
  %v798 = vunpack.c.l.b16 %v230
  %v799 = vunpack.c.l.b16 %v231
  %v800 = vunpack.c.l.b16 %v232
  %v801 = vunpack.c.l.b16 %v233
  %v802 = vunpack.c.l.b16 %v234
  %v803 = vunpack.c.l.b16 %v235
  %v804 = vunpack.c.l.b16 %v236
  %v805 = vunpack.c.l.b16 %v237
  %v806 = vunpack.c.l.b16 %v238
  %v807 = vunpack.c.l.b16 %v239
  %v808 = vunpack.c.l.b16 %v240
  %v809 = vunpack.c.l.b16 %v241
  %v810 = vunpack.c.l.b16 %v242
  %v811 = vunpack.c.l.b16 %v243
  %v812 = vunpack.c.l.b16 %v244
  %v813 = vunpack.c.l.b16 %v245
  %v814 = vunpack.c.l.b16 %v246
  %v815 = vunpack.c.l.b16 %v247
  %v816 = vunpack.c.l.b16 %v248
  %v817 = vunpack.c.l.b16 %v249
  %v818 = vunpack.c.l.b16 %v250
  %v819 = vunpack.c.l.b16 %v251
  %v820 = vunpack.c.l.b16 %v252
  %v821 = vunpack.c.l.b16 %v253
  %v822 = vunpack.c.l.b16 %v254
  %v823 = vunpack.c.l.b16 %v255
  %v824 = vunpack.c.l.b16 %v256
  %v825 = vunpack.c.l.b16 %v257
  %v826 = vunpack.c.l.b16 %v258
  %v827 = vunpack.c.l.b16 %v259
  %v828 = vunpack.c.l.b16 %v260
  %v829 = vunpack.c.l.b16 %v261
  %v830 = vunpack.c.l.b16 %v262
  %v831 = vunpack.c.l.b16 %v263
  %v832 = vunpack.c.l.b16 %v264
  %v833 = vunpack.c.l.b16 %v265
  %v834 = vunpack.c.l.b16 %v266
  %v835 = vunpack.c.l.b16 %v267
  %v836 = vunpack.c.l.b16 %v268
  %v837 = vunpack.c.l.b16 %v269
  %v838 = vunpack.c.l.b16 %v270
  %v839 = vunpack.c.l.b16 %v271
  %v840 = vunpack.c.l.b16 %v272
  %v841 = vunpack.c.l.b16 %v273
  %v842 = vunpack.c.l.b16 %v274
  %v843 = vpack.c.b16 %v588, %v587
  %v844 = vpack.c.b16 %v590, %v589
  %v845 = vpack.c.b16 %v592, %v591
  %v846 = vpack.c.b16 %v594, %v593
  %v847 = vpack.c.b16 %v596, %v595
  %v848 = vpack.c.b16 %v598, %v597
  %v849 = vpack.c.b16 %v600, %v599
  %v850 = vpack.c.b16 %v602, %v601
  %v851 = vpack.c.b16 %v604, %v603
  %v852 = vpack.c.b16 %v606, %v605
  %v853 = vpack.c.b16 %v608, %v607
  %v854 = vpack.c.b16 %v610, %v609
  %v855 = vpack.c.b16 %v612, %v611
  %v856 = vpack.c.b16 %v614, %v613
  %v857 = vpack.c.b16 %v616, %v615
  %v858 = vpack.c.b16 %v618, %v617
  %v859 = vpack.c.b16 %v620, %v619
  %v860 = vpack.c.b16 %v622, %v621
  %v861 = vpack.c.b16 %v624, %v623
  %v862 = vpack.c.b16 %v626, %v625
  %v863 = vpack.c.b16 %v628, %v627
  %v864 = vpack.c.b16 %v630, %v629
  %v865 = vpack.c.b16 %v632, %v631
  %v866 = vpack.c.b16 %v634, %v633
  %v867 = vpack.c.b16 %v636, %v635
  %v868 = vpack.c.b16 %v638, %v637
  %v869 = vpack.c.b16 %v640, %v639
  %v870 = vpack.c.b16 %v642, %v641
  %v871 = vpack.c.b16 %v644, %v643
  %v872 = vpack.c.b16 %v646, %v645
  %v873 = vpack.c.b16 %v648, %v647
  %v874 = vpack.c.b16 %v650, %v649
  %v875 = vpack.c.b16 %v652, %v651
  %v876 = vpack.c.b16 %v654, %v653
  %v877 = vpack.c.b16 %v656, %v655
  %v878 = vpack.c.b16 %v658, %v657
  %v879 = vpack.c.b16 %v660, %v659
  %v880 = vpack.c.b16 %v662, %v661
  %v881 = vpack.c.b16 %v664, %v663
  %v882 = vpack.c.b16 %v666, %v665
  %v883 = vpack.c.b16 %v668, %v667
  %v884 = vpack.c.b16 %v670, %v669
  %v885 = vpack.c.b16 %v672, %v671
  %v886 = vpack.c.b16 %v674, %v673
  %v887 = vpack.c.b16 %v676, %v675
  %v888 = vpack.c.b16 %v678, %v677
  %v889 = vpack.c.b16 %v680, %v679
  %v890 = vpack.c.b16 %v682, %v681
  %v891 = vpack.c.b16 %v684, %v683
  %v892 = vpack.c.b16 %v686, %v685
  %v893 = vpack.c.b16 %v688, %v687
  %v894 = vpack.c.b16 %v690, %v689
  %v895 = vpack.c.b16 %v692, %v691
  %v896 = vpack.c.b16 %v694, %v693
  %v897 = vpack.c.b16 %v696, %v695
  %v898 = vpack.c.b16 %v698, %v697
  %v899 = vpack.c.b16 %v700, %v699
  %v900 = vpack.c.b16 %v702, %v701
  %v901 = vpack.c.b16 %v704, %v703
  %v902 = vpack.c.b16 %v706, %v705
  %v903 = vpack.c.b16 %v708, %v707
  %v904 = vpack.c.b16 %v710, %v709
  %v905 = vpack.c.b16 %v712, %v711
  %v906 = vpack.c.b16 %v714, %v713
  %v907 = vpack.c.b16 %v716, %v715
  %v908 = vpack.c.b16 %v718, %v717
  %v909 = vpack.c.b16 %v720, %v719
  %v910 = vpack.c.b16 %v722, %v721
  %v911 = vpack.c.b16 %v724, %v723
  %v912 = vpack.c.b16 %v726, %v725
  %v913 = vpack.c.b16 %v728, %v727
  %v914 = vpack.c.b16 %v730, %v729
  %v915 = vpack.c.b16 %v732, %v731
  %v916 = vpack.c.b16 %v734, %v733
  %v917 = vpack.c.b16 %v736, %v735
  %v918 = vpack.c.b16 %v738, %v737
  %v919 = vpack.c.b16 %v740, %v739
  %v920 = vpack.c.b16 %v742, %v741
  %v921 = vpack.c.b16 %v744, %v743
  %v922 = vpack.c.b16 %v746, %v745
  %v923 = vpack.c.b16 %v748, %v747
  %v924 = vpack.c.b16 %v750, %v749
  %v925 = vpack.c.b16 %v752, %v751
  %v926 = vpack.c.b16 %v754, %v753
  %v927 = vpack.c.b16 %v756, %v755
  %v928 = vpack.c.b16 %v758, %v757
  %v929 = vpack.c.b16 %v760, %v759
  %v930 = vpack.c.b16 %v762, %v761
  %v931 = vpack.c.b16 %v764, %v763
  %v932 = vpack.c.b16 %v766, %v765
  %v933 = vpack.c.b16 %v768, %v767
  %v934 = vpack.c.b16 %v770, %v769
  %v935 = vpack.c.b16 %v772, %v771
  %v936 = vpack.c.b16 %v774, %v773
  %v937 = vpack.c.b16 %v776, %v775
  %v938 = vpack.c.b16 %v778, %v777
  %v939 = vpack.c.b16 %v780, %v779
  %v940 = vpack.c.b16 %v782, %v781
  %v941 = vpack.c.b16 %v784, %v783
  %v942 = vpack.c.b16 %v786, %v785
  %v943 = vpack.c.b16 %v788, %v787
  %v944 = vpack.c.b16 %v790, %v789
  %v945 = vpack.c.b16 %v792, %v791
  %v946 = vpack.c.b16 %v794, %v793
  %v947 = vpack.c.b16 %v796, %v795
  %v948 = vpack.c.b16 %v798, %v797
  %v949 = vpack.c.b16 %v800, %v799
  %v950 = vpack.c.b16 %v802, %v801
  %v951 = vpack.c.b16 %v804, %v803
  %v952 = vpack.c.b16 %v806, %v805
  %v953 = vpack.c.b16 %v808, %v807
  %v954 = vpack.c.b16 %v810, %v809
  %v955 = vpack.c.b16 %v812, %v811
  %v956 = vpack.c.b16 %v814, %v813
  %v957 = vpack.c.b16 %v816, %v815
  %v958 = vpack.c.b16 %v818, %v817
  %v959 = vpack.c.b16 %v820, %v819
  %v960 = vpack.c.b16 %v822, %v821
  %v961 = vpack.c.b16 %v824, %v823
  %v962 = vpack.c.b16 %v826, %v825
  %v963 = vpack.c.b16 %v828, %v827
  %v964 = vpack.c.b16 %v830, %v829
  %v965 = vpack.c.b16 %v832, %v831
  %v966 = vpack.c.b16 %v834, %v833
  %v967 = vpack.c.b16 %v836, %v835
  %v968 = vpack.c.b16 %v838, %v837
  %v969 = vpack.c.b16 %v840, %v839
  %v970 = vpack.c.b16 %v842, %v841
  %1099 = vmatpush.bf16.msra.mxu0 %v850
  %1100 = vmatpush.bf16.msra.mxu0 %v849
  %1101 = vmatpush.bf16.msra.mxu0 %v848
  %1102 = vmatpush.bf16.msra.mxu0 %v847
  %1103 = vmatpush.bf16.msra.mxu0 %v846
  %1104 = vmatpush.bf16.msra.mxu0 %v845
  %1105 = vmatpush.bf16.msra.mxu0 %v844
  %1106 = vmatpush.bf16.msra.mxu0 %v843
  %1107 = vmatmul.bf16.gmra.mxu0 %v299
  %v1108 = vpop.f32.mrf.mxu0
  %v1109 = vadd.f32 0.0, %v1108
  %v1110 = vpop.f32.mrf.mxu0
  %1111 = vdwg.mxu0
  %1112 = vmatpush.bf16.msra.mxu0 %v858
  %1113 = vmatpush.bf16.msra.mxu0 %v857
  %1114 = vmatpush.bf16.msra.mxu0 %v856
  %1115 = vmatpush.bf16.msra.mxu0 %v855
  %1116 = vmatpush.bf16.msra.mxu0 %v854
  %1117 = vmatpush.bf16.msra.mxu0 %v853
  %1118 = vmatpush.bf16.msra.mxu0 %v852
  %1119 = vmatpush.bf16.msra.mxu0 %v851
  %1120 = vmatmul.bf16.gmra.mxu0 %v300
  %v1121 = vpop.f32.mrf.mxu0
  %v1122 = vadd.f32 %v1109, %v1121
  %v1123 = vpop.f32.mrf.mxu0
  %1124 = vdwg.mxu0
  %1125 = vmatpush.bf16.msra.mxu0 %v866
  %1126 = vmatpush.bf16.msra.mxu0 %v865
  %1127 = vmatpush.bf16.msra.mxu0 %v864
  %1128 = vmatpush.bf16.msra.mxu0 %v863
  %1129 = vmatpush.bf16.msra.mxu0 %v862
  %1130 = vmatpush.bf16.msra.mxu0 %v861
  %1131 = vmatpush.bf16.msra.mxu0 %v860
  %1132 = vmatpush.bf16.msra.mxu0 %v859
  %1133 = vmatmul.bf16.gmra.mxu0 %v301
  %v1134 = vpop.f32.mrf.mxu0
  %v1135 = vadd.f32 %v1122, %v1134
  %v1136 = vpop.f32.mrf.mxu0
  %1137 = vdwg.mxu0
  %1138 = vmatpush.bf16.msra.mxu0 %v874
  %1139 = vmatpush.bf16.msra.mxu0 %v873
  %1140 = vmatpush.bf16.msra.mxu0 %v872
  %1141 = vmatpush.bf16.msra.mxu0 %v871
  %1142 = vmatpush.bf16.msra.mxu0 %v870
  %1143 = vmatpush.bf16.msra.mxu0 %v869
  %1144 = vmatpush.bf16.msra.mxu0 %v868
  %1145 = vmatpush.bf16.msra.mxu0 %v867
  %1146 = vmatmul.bf16.gmra.mxu0 %v302
  %v1147 = vpop.f32.mrf.mxu0
  %v1148 = vadd.f32 %v1135, %v1147
  %v1149 = vpop.f32.mrf.mxu0
  %1150 = vdwg.mxu0
  %1151 = vmatpush.bf16.msra.mxu0 %v882
  %1152 = vmatpush.bf16.msra.mxu0 %v881
  %1153 = vmatpush.bf16.msra.mxu0 %v880
  %1154 = vmatpush.bf16.msra.mxu0 %v879
  %1155 = vmatpush.bf16.msra.mxu0 %v878
  %1156 = vmatpush.bf16.msra.mxu0 %v877
  %1157 = vmatpush.bf16.msra.mxu0 %v876
  %1158 = vmatpush.bf16.msra.mxu0 %v875
  %1159 = vmatmul.bf16.gmra.mxu0 %v303
  %v1160 = vpop.f32.mrf.mxu0
  %v1161 = vadd.f32 %v1148, %v1160
  %v1162 = vpop.f32.mrf.mxu0
  %1163 = vdwg.mxu0
  %1164 = vmatpush.bf16.msra.mxu0 %v890
  %1165 = vmatpush.bf16.msra.mxu0 %v889
  %1166 = vmatpush.bf16.msra.mxu0 %v888
  %1167 = vmatpush.bf16.msra.mxu0 %v887
  %1168 = vmatpush.bf16.msra.mxu0 %v886
  %1169 = vmatpush.bf16.msra.mxu0 %v885
  %1170 = vmatpush.bf16.msra.mxu0 %v884
  %1171 = vmatpush.bf16.msra.mxu0 %v883
  %1172 = vmatmul.bf16.gmra.mxu0 %v304
  %v1173 = vpop.f32.mrf.mxu0
  %v1174 = vadd.f32 %v1161, %v1173
  %v1175 = vpop.f32.mrf.mxu0
  %1176 = vdwg.mxu0
  %1177 = vmatpush.bf16.msra.mxu0 %v898
  %1178 = vmatpush.bf16.msra.mxu0 %v897
  %1179 = vmatpush.bf16.msra.mxu0 %v896
  %1180 = vmatpush.bf16.msra.mxu0 %v895
  %1181 = vmatpush.bf16.msra.mxu0 %v894
  %1182 = vmatpush.bf16.msra.mxu0 %v893
  %1183 = vmatpush.bf16.msra.mxu0 %v892
  %1184 = vmatpush.bf16.msra.mxu0 %v891
  %1185 = vmatmul.bf16.gmra.mxu0 %v305
  %v1186 = vpop.f32.mrf.mxu0
  %v1187 = vadd.f32 %v1174, %v1186
  %v1188 = vpop.f32.mrf.mxu0
  %1189 = vdwg.mxu0
  %1190 = vmatpush.bf16.msra.mxu0 %v906
  %1191 = vmatpush.bf16.msra.mxu0 %v905
  %1192 = vmatpush.bf16.msra.mxu0 %v904
  %1193 = vmatpush.bf16.msra.mxu0 %v903
  %1194 = vmatpush.bf16.msra.mxu0 %v902
  %1195 = vmatpush.bf16.msra.mxu0 %v901
  %1196 = vmatpush.bf16.msra.mxu0 %v900
  %1197 = vmatpush.bf16.msra.mxu0 %v899
  %1198 = vmatmul.bf16.gmra.mxu0 %v306
  %v1199 = vpop.f32.mrf.mxu0
  %v1200 = vadd.f32 %v1187, %v1199
  %v1201 = vpop.f32.mrf.mxu0
  %1202 = vdwg.mxu0
  %1203 = vmatpush.bf16.msra.mxu0 %v914
  %1204 = vmatpush.bf16.msra.mxu0 %v913
  %1205 = vmatpush.bf16.msra.mxu0 %v912
  %1206 = vmatpush.bf16.msra.mxu0 %v911
  %1207 = vmatpush.bf16.msra.mxu0 %v910
  %1208 = vmatpush.bf16.msra.mxu0 %v909
  %1209 = vmatpush.bf16.msra.mxu0 %v908
  %1210 = vmatpush.bf16.msra.mxu0 %v907
  %1211 = vmatmul.bf16.gmra.mxu0 %v307
  %v1212 = vpop.f32.mrf.mxu0
  %v1213 = vadd.f32 %v1200, %v1212
  %v1214 = vpop.f32.mrf.mxu0
  %1215 = vdwg.mxu0
  %1216 = vmatpush.bf16.msra.mxu0 %v922
  %1217 = vmatpush.bf16.msra.mxu0 %v921
  %1218 = vmatpush.bf16.msra.mxu0 %v920
  %1219 = vmatpush.bf16.msra.mxu0 %v919
  %1220 = vmatpush.bf16.msra.mxu0 %v918
  %1221 = vmatpush.bf16.msra.mxu0 %v917
  %1222 = vmatpush.bf16.msra.mxu0 %v916
  %1223 = vmatpush.bf16.msra.mxu0 %v915
  %1224 = vmatmul.bf16.gmra.mxu0 %v308
  %v1225 = vpop.f32.mrf.mxu0
  %v1226 = vadd.f32 %v1213, %v1225
  %v1227 = vpop.f32.mrf.mxu0
  %1228 = vdwg.mxu0
  %1229 = vmatpush.bf16.msra.mxu0 %v930
  %1230 = vmatpush.bf16.msra.mxu0 %v929
  %1231 = vmatpush.bf16.msra.mxu0 %v928
  %1232 = vmatpush.bf16.msra.mxu0 %v927
  %1233 = vmatpush.bf16.msra.mxu0 %v926
  %1234 = vmatpush.bf16.msra.mxu0 %v925
  %1235 = vmatpush.bf16.msra.mxu0 %v924
  %1236 = vmatpush.bf16.msra.mxu0 %v923
  %1237 = vmatmul.bf16.gmra.mxu0 %v309
  %v1238 = vpop.f32.mrf.mxu0
  %v1239 = vadd.f32 %v1226, %v1238
  %v1240 = vpop.f32.mrf.mxu0
  %1241 = vdwg.mxu0
  %1242 = vmatpush.bf16.msra.mxu0 %v938
  %1243 = vmatpush.bf16.msra.mxu0 %v937
  %1244 = vmatpush.bf16.msra.mxu0 %v936
  %1245 = vmatpush.bf16.msra.mxu0 %v935
  %1246 = vmatpush.bf16.msra.mxu0 %v934
  %1247 = vmatpush.bf16.msra.mxu0 %v933
  %1248 = vmatpush.bf16.msra.mxu0 %v932
  %1249 = vmatpush.bf16.msra.mxu0 %v931
  %1250 = vmatmul.bf16.gmra.mxu0 %v310
  %v1251 = vpop.f32.mrf.mxu0
  %v1252 = vadd.f32 %v1239, %v1251
  %v1253 = vpop.f32.mrf.mxu0
  %1254 = vdwg.mxu0
  %1255 = vmatpush.bf16.msra.mxu0 %v946
  %1256 = vmatpush.bf16.msra.mxu0 %v945
  %1257 = vmatpush.bf16.msra.mxu0 %v944
  %1258 = vmatpush.bf16.msra.mxu0 %v943
  %1259 = vmatpush.bf16.msra.mxu0 %v942
  %1260 = vmatpush.bf16.msra.mxu0 %v941
  %1261 = vmatpush.bf16.msra.mxu0 %v940
  %1262 = vmatpush.bf16.msra.mxu0 %v939
  %1263 = vmatmul.bf16.gmra.mxu0 %v311
  %v1264 = vpop.f32.mrf.mxu0
  %v1265 = vadd.f32 %v1252, %v1264
  %v1266 = vpop.f32.mrf.mxu0
  %1267 = vdwg.mxu0
  %1268 = vmatpush.bf16.msra.mxu0 %v954
  %1269 = vmatpush.bf16.msra.mxu0 %v953
  %1270 = vmatpush.bf16.msra.mxu0 %v952
  %1271 = vmatpush.bf16.msra.mxu0 %v951
  %1272 = vmatpush.bf16.msra.mxu0 %v950
  %1273 = vmatpush.bf16.msra.mxu0 %v949
  %1274 = vmatpush.bf16.msra.mxu0 %v948
  %1275 = vmatpush.bf16.msra.mxu0 %v947
  %1276 = vmatmul.bf16.gmra.mxu0 %v312
  %v1277 = vpop.f32.mrf.mxu0
  %v1278 = vadd.f32 %v1265, %v1277
  %v1279 = vpop.f32.mrf.mxu0
  %1280 = vdwg.mxu0
  %1281 = vmatpush.bf16.msra.mxu0 %v962
  %1282 = vmatpush.bf16.msra.mxu0 %v961
  %1283 = vmatpush.bf16.msra.mxu0 %v960
  %1284 = vmatpush.bf16.msra.mxu0 %v959
  %1285 = vmatpush.bf16.msra.mxu0 %v958
  %1286 = vmatpush.bf16.msra.mxu0 %v957
  %1287 = vmatpush.bf16.msra.mxu0 %v956
  %1288 = vmatpush.bf16.msra.mxu0 %v955
  %1289 = vmatmul.bf16.gmra.mxu0 %v313
  %v1290 = vpop.f32.mrf.mxu0
  %v1291 = vadd.f32 %v1278, %v1290
  %v1292 = vpop.f32.mrf.mxu0
  %1293 = vdwg.mxu0
  %1294 = vmatpush.bf16.msra.mxu0 %v970
  %1295 = vmatpush.bf16.msra.mxu0 %v969
  %1296 = vmatpush.bf16.msra.mxu0 %v968
  %1297 = vmatpush.bf16.msra.mxu0 %v967
  %1298 = vmatpush.bf16.msra.mxu0 %v966
  %1299 = vmatpush.bf16.msra.mxu0 %v965
  %1300 = vmatpush.bf16.msra.mxu0 %v964
  %1301 = vmatpush.bf16.msra.mxu0 %v963
  %1302 = vmatmul.bf16.gmra.mxu0 %v314
  %v1303 = vpop.f32.mrf.mxu0
  %v1304 = vadd.f32 %v1291, %v1303
  %v1305 = vpop.f32.mrf.mxu0
  %1306 = vdwg.mxu0
  %1307 = vst [vmem:[%s2] sm:$0xff] %v1304
  // Predicated region
  $region10: #{discriminator_forward.5} parent=0 // pred_check
    _
  $region11: #{discriminator_forward.5} parent=0 // pred_check_branch
    %1309 = sbr.rel (0) target = $region13
  $region12: #{discriminator_forward.5} parent=0 // pred_region
    _
  $region13: #{discriminator_forward.5} parent=0 // pred_fallthru
    _
  // Predicated region
  $region14: #{discriminator_forward.5} parent=0 // pred_check
    _
  $region15: #{discriminator_forward.5} parent=0 // pred_check_branch
    %1311 = sbr.rel (0) target = $region17
  $region16: #{discriminator_forward.5} parent=0 // pred_region
    _
  $region17: #{discriminator_forward.5} parent=0 // pred_fallthru
    _

</llo_original>
